<compile_context>
chip_gen: v6e
topology: v6e:2x2x1
jax: 0.10.0
libtpu: 0.0.40
codegen_flags: <defaults>
</compile_context>

<pallas_src>
import math
import functools

import jax
import jax.numpy as jnp
from jax import lax
from jax.experimental import pallas as pl
from jax.experimental.pallas import tpu as pltpu


# ----------------------------- glue (plain JAX) ------------------------------

def _bilinear_up2x_nchw(x):
    """x: (B, C, H, W) -> (B, C, 2H, 2W). Matches torch Upsample(scale_factor=2,
    mode='bilinear', align_corners=False)."""
    B, C, H, W = x.shape

    def src_idx(out_size, in_size):
        scale = in_size / out_size
        o = jnp.arange(out_size, dtype=jnp.float32)
        s = jnp.maximum((o + 0.5) * scale - 0.5, 0.0)
        lo = jnp.floor(s).astype(jnp.int32)
        frac = s - lo.astype(jnp.float32)
        hi = jnp.minimum(lo + 1, in_size - 1)
        return lo, hi, frac

    lo_h, hi_h, fh = src_idx(2 * H, H)
    lo_w, hi_w, fw = src_idx(2 * W, W)
    xh = (x[:, :, lo_h, :] * (1.0 - fh)[None, None, :, None]
          + x[:, :, hi_h, :] * fh[None, None, :, None])
    xhw = (xh[:, :, :, lo_w] * (1.0 - fw)[None, None, None, :]
           + xh[:, :, :, hi_w] * fw[None, None, None, :])
    return xhw


# ------------------------------ Pallas kernel --------------------------------

def _upblock_kernel(x1_ref, x2_ref, nf_ref,
                    ws_ref, bs_ref, w1a_ref, w1b_ref, b1_ref,
                    w2_ref, b2_ref, wmod_ref, bmod_ref, wsd_ref, wsq_ref,
                    out_ref, pad_ref, *, W2, halo, sdft_scale):
    C = out_ref.shape[1]          # out block: (1, C_out, N)
    N = out_ref.shape[2]
    cdt = pad_ref.dtype           # bf16 storage dtype for conv operands

    def leaky(v):
        return jnp.where(v >= 0, v, 0.2 * v)

    # Zero only the halo borders of the flat padded scratch; the interior is
    # fully overwritten before every conv3x3 below.  Re-done each grid step so
    # the batch axis can safely be "parallel" (megacore sharding).
    pad_ref[:, :halo] = jnp.zeros((C, halo), cdt)
    pad_ref[:, halo + N:] = jnp.zeros((C, halo), cdt)

    # Column-validity masks for the horizontal 3x3 taps, generated in-kernel
    # (no mask DMA).  Flat index n = y*W2 + x.
    col = lax.broadcasted_iota(jnp.int32, (1, N), 1)
    if (W2 & (W2 - 1)) == 0:
        colw = col & (W2 - 1)
    else:
        colw = col % W2
    mask_l = (colw > 0).astype(jnp.float32).astype(cdt)       # zero where x == 0
    mask_r = (colw < W2 - 1).astype(jnp.float32).astype(cdt)  # zero where x == W2-1

    def conv3x3_from_pad(w_ref):
        # 9 accumulating K=C dots over statically shifted views of the scratch
        # (no materialized (9*C, N) im2col temporary).  Vertical out-of-range
        # taps read the zero halo; horizontal wrap is masked per output column.
        acc = None
        for ky in range(3):
            for kx in range(3):
                s = (ky - 1) * W2 + (kx - 1)
                t = pad_ref[:, halo + s:halo + s + N]
                if kx == 0:
                    t = t * mask_l
                elif kx == 2:
                    t = t * mask_r
                d = jnp.dot(w_ref[ky * 3 + kx], t,
                            preferred_element_type=jnp.float32)
                acc = d if acc is None else acc + d
        return acc

    x1u = x1_ref[0]               # (C1, N)  bf16 upsampled x1
    x2s = x2_ref[0]               # (C2, N)  bf16 x2[:, ::4]
    nf = nf_ref[0]                # (1, D)   f32 normal-feature row

    # skip branch: conv_s 1x1 on the upsampled x1
    x1_s = (jnp.dot(ws_ref[...], x1u, preferred_element_type=jnp.float32)
            + bs_ref[...])

    # conv_cat 1x1 (concat fused away: two dots) -> LeakyReLU(0.2), written
    # straight into the conv scratch interior (no separate h1 copy).
    h1 = leaky(jnp.dot(w1a_ref[...], x1u, preferred_element_type=jnp.float32)
               + jnp.dot(w1b_ref[...], x2s, preferred_element_type=jnp.float32)
               + b1_ref[...])
    pad_ref[:, halo:halo + N] = h1.astype(cdt)

    # conv_cat 3x3 (pad 1) -> LeakyReLU(0.2)
    h2 = leaky(conv3x3_from_pad(w2_ref) + b2_ref[...])

    # SDFT style: (C,D)@(D,1) done on the VPU (mul + lane reduce), keeping the
    # MXU stream for the convolutions.  Demodulation per output channel.
    style = jnp.sum(wmod_ref[...] * nf, axis=1, keepdims=True) + bmod_ref[...]
    style_s = style * sdft_scale                                   # (C, 1)
    sumsq = jnp.dot(wsq_ref[...], style_s * style_s,
                    preferred_element_type=jnp.float32)            # (C, 1)
    demod = lax.rsqrt(sumsq + 1e-8)

    # SDFT conv: style folded into the activation (conv is linear in the
    # weight); demod scales output channels.
    pad_ref[:, halo:halo + N] = (h2 * style_s).astype(cdt)
    y = conv3x3_from_pad(wsd_ref) * demod

    out_ref[0] = (y + x1_s).astype(out_ref.dtype)


# ------------------------------ module wrapper -------------------------------

def up_block_forward(x1, x2, normal_feat, params):
    """Inputs in torch NCHW convention:
       x1: (B, Cin//2, H, W), x2: (B, Cin//2, 2H, 2W), normal_feat: (B, D, 1, 1)."""
    B, C1, H, W = x1.shape
    H2, W2 = 2 * H, 2 * W
    N = H2 * W2
    C_out = params["conv_s_w"].shape[0]
    D = normal_feat.shape[1]

    # The shared pad scratch assumes both 3x3 convs run on C_out-channel inputs.
    assert params["cat2_w"].shape[1] == C_out, "cat 3x3 conv must be C_out -> C_out"
    assert params["sdft_w"].shape[2] == C_out, "SDFT conv must be C_out -> C_out"

    cdt = jnp.bfloat16   # conv operand storage dtype (f32 accumulation in-kernel)

    # host-side glue (pure data movement): upsample, channel stride, flatten
    x1_up = _bilinear_up2x_nchw(x1)                               # (B, C1, H2, W2)
    x2_sub = x2[:, ::4, :, :]                                     # (B, C2, H2, W2)
    C2 = x2_sub.shape[1]
    x1_flat = x1_up.reshape(B, C1, N).astype(cdt)
    x2_flat = x2_sub.reshape(B, C2, N).astype(cdt)
    nf = normal_feat.reshape(B, 1, D).astype(jnp.float32)

    # weight prep: torch OIHW -> per-tap (9, C_out, C_in) matmul layouts
    ws = params["conv_s_w"][:, :, 0, 0].astype(cdt)               # (C_out, C1)
    bs = params["conv_s_b"].reshape(C_out, 1).astype(jnp.float32)
    w1 = params["cat0_w"][:, :, 0, 0]
    w1a = w1[:, :C1].astype(cdt)                                  # (C_out, C1)
    w1b = w1[:, C1:].astype(cdt)                                  # (C_out, C2)
    b1 = params["cat0_b"].reshape(C_out, 1).astype(jnp.float32)
    w2t = jnp.transpose(params["cat2_w"], (2, 3, 0, 1)).reshape(9, C_out, C_out).astype(cdt)
    b2 = params["cat2_b"].reshape(C_out, 1).astype(jnp.float32)
    wmod = params["mod_w"][:, :, 0, 0].astype(jnp.float32)        # (C_out, D)
    bmod = params["mod_b"].reshape(C_out, 1).astype(jnp.float32)
    wsdt = jnp.transpose(params["sdft_w"][0], (2, 3, 0, 1)).reshape(9, C_out, C_out).astype(cdt)
    wsq = jnp.sum(params["sdft_w"][0].astype(jnp.float32) ** 2, axis=(2, 3))  # (C_out, C_out)
    sdft_scale = 1.0 / math.sqrt(C_out * 3 * 3)

    # halo >= W2+1 so every shifted tap stays inside the scratch; rounded to a
    # lane multiple so the interior write is an aligned store.
    halo = ((W2 + 1 + 127) // 128) * 128

    kernel = functools.partial(_upblock_kernel, W2=W2, halo=halo,
                               sdft_scale=sdft_scale)

    def _const_index_map(nd):
        def im(b):
            return (0,) * nd
        return im

    def wspec(shape):
        return pl.BlockSpec(shape, _const_index_map(len(shape)))

    out_flat = pl.pallas_call(
        kernel,
        out_shape=jax.ShapeDtypeStruct((B, C_out, N), jnp.float32),
        grid_spec=pltpu.PrefetchScalarGridSpec(
            num_scalar_prefetch=0,
            grid=(B,),
            in_specs=[
                pl.BlockSpec((1, C1, N), lambda b: (b, 0, 0)),   # upsampled x1
                pl.BlockSpec((1, C2, N), lambda b: (b, 0, 0)),   # x2[:, ::4]
                pl.BlockSpec((1, 1, D), lambda b: (b, 0, 0)),    # normal_feat row
                wspec((C_out, C1)),        # conv_s weight
                wspec((C_out, 1)),         # conv_s bias
                wspec((C_out, C1)),        # cat 1x1 weight (x1 half)
                wspec((C_out, C2)),        # cat 1x1 weight (x2 half)
                wspec((C_out, 1)),         # cat 1x1 bias
                wspec((9, C_out, C_out)),  # cat 3x3 weight, per-tap
                wspec((C_out, 1)),         # cat 3x3 bias
                wspec((C_out, D)),         # SDFT modulation weight
                wspec((C_out, 1)),         # SDFT modulation bias
                wspec((9, C_out, C_out)),  # SDFT 3x3 weight, per-tap
                wspec((C_out, C_out)),     # sum_k w^2 for demodulation
            ],
            out_specs=pl.BlockSpec((1, C_out, N), lambda b: (b, 0, 0)),
            scratch_shapes=[pltpu.VMEM((C_out, N + 2 * halo), cdt)],
        ),
        compiler_params=pltpu.CompilerParams(dimension_semantics=("parallel",)),
    )(x1_flat, x2_flat, nf, ws, bs, w1a, w1b, b1, w2t, b2, wmod, bmod, wsdt, wsq)

    return out_flat.reshape(B, C_out, H2, W2)     # already NCHW


# ------------------------------ pure-JAX reference ---------------------------

def up_block_reference(x1, x2, normal_feat, params):
    B = x1.shape[0]
    C_out = params["conv_s_w"].shape[0]
    x1_up = _bilinear_up2x_nchw(x1)
    xcat = jnp.concatenate([x1_up, x2[:, ::4, :, :]], axis=1)

    def conv(x, w, pad):
        return lax.conv_general_dilated(x, w, (1, 1), [(pad, pad), (pad, pad)],
                                        dimension_numbers=("NCHW", "OIHW", "NCHW"))

    def leaky(v):
        return jnp.where(v >= 0, v, 0.2 * v)

    x1_s = conv(x1_up, params["conv_s_w"], 0) + params["conv_s_b"][None, :, None, None]
    h = leaky(conv(xcat, params["cat0_w"], 0) + params["cat0_b"][None, :, None, None])
    h = leaky(conv(h, params["cat2_w"], 1) + params["cat2_b"][None, :, None, None])

    nf = normal_feat[:, :, 0, 0]
    style = nf @ jnp.transpose(params["mod_w"][:, :, 0, 0]) + params["mod_b"]
    scale = 1.0 / math.sqrt(C_out * 9)
    w0 = params["sdft_w"][0]
    outs = []
    for b in range(B):
        wb = scale * w0 * style[b][None, :, None, None]
        demod = lax.rsqrt(jnp.sum(wb ** 2, axis=(1, 2, 3)) + 1e-8)
        wb = wb * demod[:, None, None, None]
        outs.append(conv(h[b:b + 1], wb, 1))
    y = jnp.concatenate(outs, axis=0)
    return y + x1_s


# ----------------------------------- main -------------------------------------

if __name__ == "__main__":
    key = jax.random.PRNGKey(0)
    B = 2
    in_channels = 8
    out_channels = 8
    normfeat_dim = 8
    H = W = 8
    C1 = in_channels // 2
    Ccat = in_channels // 2 + in_channels // 8

    ks = jax.random.split(key, 12)
    x1 = jax.random.normal(ks[0], (B, C1, H, W), jnp.float32)
    x2 = jax.random.normal(ks[1], (B, in_channels // 2, 2 * H, 2 * W), jnp.float32)
    normal_feat = jax.random.normal(ks[2], (B, normfeat_dim, 1, 1), jnp.float32)

    params = {
        "conv_s_w": 0.3 * jax.random.normal(ks[3], (out_channels, C1, 1, 1), jnp.float32),
        "conv_s_b": 0.1 * jax.random.normal(ks[4], (out_channels,), jnp.float32),
        "cat0_w": 0.3 * jax.random.normal(ks[5], (out_channels, Ccat, 1, 1), jnp.float32),
        "cat0_b": 0.1 * jax.random.normal(ks[6], (out_channels,), jnp.float32),
        "cat2_w": 0.2 * jax.random.normal(ks[7], (out_channels, out_channels, 3, 3), jnp.float32),
        "cat2_b": 0.1 * jax.random.normal(ks[8], (out_channels,), jnp.float32),
        "mod_w": 0.3 * jax.random.normal(ks[9], (out_channels, normfeat_dim, 1, 1), jnp.float32),
        "mod_b": 0.1 * jax.random.normal(ks[10], (out_channels,), jnp.float32),
        "sdft_w": jax.random.normal(ks[11], (1, out_channels, out_channels, 3, 3), jnp.float32),
    }

    fwd = jax.jit(up_block_forward)
    out = jax.block_until_ready(fwd(x1, x2, normal_feat, params))
    ref = jax.block_until_ready(jax.jit(up_block_reference)(x1, x2, normal_feat, params))

    assert out.shape == (B, out_channels, 2 * H, 2 * W)
    err = float(jnp.max(jnp.abs(out - ref)))
    scale = float(jnp.max(jnp.abs(ref)))
    # Kernel runs bf16 MXU operands (f32 accumulation); the f32 reference convs
    # under default TPU precision carry comparable bf16-level rounding, so the
    # comparison tolerance is set at bf16 scale (real layout/halo/mask bugs are
    # O(0.1-1) and still trip this check).
    tol = 3e-2 * max(1.0, scale)
    if not (err <= tol):
        raise AssertionError(f"kernel/reference mismatch: max abs err {err} > tol {tol}")
    print("KERNEL_OK")
</pallas_src>

<mosaic_0001>
module attributes {stable_mosaic.version = 11 : i64} {
  func.func @_upblock_kernel(%arg0: i32, %arg1: memref<1x4x256xbf16, #tpu.memory_space<vmem>>, %arg2: memref<1x1x256xbf16, #tpu.memory_space<vmem>>, %arg3: memref<1x1x8xf32, #tpu.memory_space<vmem>>, %arg4: memref<8x4xbf16, #tpu.memory_space<vmem>>, %arg5: memref<8x1xf32, #tpu.memory_space<vmem>>, %arg6: memref<8x4xbf16, #tpu.memory_space<vmem>>, %arg7: memref<8x1xbf16, #tpu.memory_space<vmem>>, %arg8: memref<8x1xf32, #tpu.memory_space<vmem>>, %arg9: memref<9x8x8xbf16, #tpu.memory_space<vmem>>, %arg10: memref<8x1xf32, #tpu.memory_space<vmem>>, %arg11: memref<8x8xf32, #tpu.memory_space<vmem>>, %arg12: memref<8x1xf32, #tpu.memory_space<vmem>>, %arg13: memref<9x8x8xbf16, #tpu.memory_space<vmem>>, %arg14: memref<8x8xf32, #tpu.memory_space<vmem>>, %arg15: memref<1x8x256xf32, #tpu.memory_space<vmem>>, %arg16: memref<8x512xbf16, #tpu.memory_space<vmem>>) attributes {dimension_semantics = [#tpu.dimension_semantics<parallel>], iteration_bounds = array<i64: 2>, scalar_prefetch = 0 : i64, scratch_operands = 1 : i64, tpu.core_type = #tpu.core_type<tc>, window_params = [{transform_indices = @transform_0, window_bounds = array<i64: 1, 4, 256>}, {transform_indices = @transform_1, window_bounds = array<i64: 1, 1, 256>}, {transform_indices = @transform_2, window_bounds = array<i64: 1, 1, 8>}, {pipeline_mode = #tpu.pipeline_mode<synchronous>, transform_indices = @transform_3, window_bounds = array<i64: 8, 4>}, {pipeline_mode = #tpu.pipeline_mode<synchronous>, transform_indices = @transform_4, window_bounds = array<i64: 8, 1>}, {pipeline_mode = #tpu.pipeline_mode<synchronous>, transform_indices = @transform_5, window_bounds = array<i64: 8, 4>}, {pipeline_mode = #tpu.pipeline_mode<synchronous>, transform_indices = @transform_6, window_bounds = array<i64: 8, 1>}, {pipeline_mode = #tpu.pipeline_mode<synchronous>, transform_indices = @transform_7, window_bounds = array<i64: 8, 1>}, {pipeline_mode = #tpu.pipeline_mode<synchronous>, transform_indices = @transform_8, window_bounds = array<i64: 9, 8, 8>}, {pipeline_mode = #tpu.pipeline_mode<synchronous>, transform_indices = @transform_9, window_bounds = array<i64: 8, 1>}, {pipeline_mode = #tpu.pipeline_mode<synchronous>, transform_indices = @transform_10, window_bounds = array<i64: 8, 8>}, {pipeline_mode = #tpu.pipeline_mode<synchronous>, transform_indices = @transform_11, window_bounds = array<i64: 8, 1>}, {pipeline_mode = #tpu.pipeline_mode<synchronous>, transform_indices = @transform_12, window_bounds = array<i64: 9, 8, 8>}, {pipeline_mode = #tpu.pipeline_mode<synchronous>, transform_indices = @transform_13, window_bounds = array<i64: 8, 8>}, {transform_indices = @transform_14, window_bounds = array<i64: 1, 8, 256>}]} {
    %cst = arith.constant 0.000000e+00 : bf16
    %0 = vector.broadcast %cst : bf16 to vector<8x128xbf16>
    %c0 = arith.constant 0 : index
    %c0_0 = arith.constant 0 : index
    %1 = vector.load %arg16[%c0, %c0_0] : memref<8x512xbf16, #tpu.memory_space<vmem>>, vector<8x128xbf16>
    tpu.vector_store %arg16[%c0, %c0_0], %0 {strides = array<i32>} : memref<8x512xbf16, #tpu.memory_space<vmem>>, vector<8x128xbf16>,
    %cst_1 = arith.constant 0.000000e+00 : bf16
    %2 = vector.broadcast %cst_1 : bf16 to vector<8x128xbf16>
    %c0_2 = arith.constant 0 : index
    %c384 = arith.constant 384 : index
    %3 = vector.load %arg16[%c0_2, %c384] : memref<8x512xbf16, #tpu.memory_space<vmem>>, vector<8x128xbf16>
    tpu.vector_store %arg16[%c0_2, %c384], %2 {strides = array<i32>} : memref<8x512xbf16, #tpu.memory_space<vmem>>, vector<8x128xbf16>,
    %4 = tpu.iota {dimensions = array<i32: 1>} : vector<1x256xi32>
    %c15_i32 = arith.constant 15 : i32
    %5 = vector.broadcast %c15_i32 : i32 to vector<1x256xi32>
    %6 = arith.andi %4, %5 : vector<1x256xi32>
    %c0_i32 = arith.constant 0 : i32
    %7 = vector.broadcast %c0_i32 : i32 to vector<1x256xi32>
    %8 = arith.cmpi sgt, %6, %7 : vector<1x256xi32>
    %9 = arith.extui %8 : vector<1x256xi1> to vector<1x256xi32>
    %10 = arith.sitofp %9 : vector<1x256xi32> to vector<1x256xf32>
    %11 = arith.truncf %10 : vector<1x256xf32> to vector<1x256xbf16>
    %c15_i32_3 = arith.constant 15 : i32
    %12 = vector.broadcast %c15_i32_3 : i32 to vector<1x256xi32>
    %13 = arith.cmpi slt, %6, %12 : vector<1x256xi32>
    %14 = arith.extui %13 : vector<1x256xi1> to vector<1x256xi32>
    %15 = arith.sitofp %14 : vector<1x256xi32> to vector<1x256xf32>
    %16 = arith.truncf %15 : vector<1x256xf32> to vector<1x256xbf16>
    %c0_4 = arith.constant 0 : index
    %c0_5 = arith.constant 0 : index
    %c0_6 = arith.constant 0 : index
    %17 = vector.load %arg1[%c0_4, %c0_5, %c0_6] : memref<1x4x256xbf16, #tpu.memory_space<vmem>>, vector<1x4x256xbf16>
    %18 = vector.shape_cast %17 : vector<1x4x256xbf16> to vector<4x256xbf16>
    %c0_7 = arith.constant 0 : index
    %c0_8 = arith.constant 0 : index
    %c0_9 = arith.constant 0 : index
    %19 = vector.load %arg2[%c0_7, %c0_8, %c0_9] : memref<1x1x256xbf16, #tpu.memory_space<vmem>>, vector<1x1x256xbf16>
    %20 = vector.shape_cast %19 : vector<1x1x256xbf16> to vector<1x256xbf16>
    %c0_10 = arith.constant 0 : index
    %c0_11 = arith.constant 0 : index
    %c0_12 = arith.constant 0 : index
    %21 = vector.load %arg3[%c0_10, %c0_11, %c0_12] : memref<1x1x8xf32, #tpu.memory_space<vmem>>, vector<1x1x8xf32>
    %22 = vector.shape_cast %21 : vector<1x1x8xf32> to vector<1x8xf32>
    %c0_13 = arith.constant 0 : index
    %c0_14 = arith.constant 0 : index
    %23 = vector.load %arg4[%c0_13, %c0_14] : memref<8x4xbf16, #tpu.memory_space<vmem>>, vector<8x4xbf16>
    %cst_15 = arith.constant dense<0.000000e+00> : vector<8x256xf32>
    %24 = tpu.matmul %23, %18, %cst_15 {dimension_numbers = #tpu.dot_dimension_numbers<[1], [0], [0], [1], [0, 0, 1, 1], [], []>} : vector<8x4xbf16>, vector<4x256xbf16>, vector<8x256xf32> -> vector<8x256xf32>
    %c0_16 = arith.constant 0 : index
    %c0_17 = arith.constant 0 : index
    %25 = vector.load %arg5[%c0_16, %c0_17] : memref<8x1xf32, #tpu.memory_space<vmem>>, vector<8x1xf32>
    %26 = vector.broadcast %25 : vector<8x1xf32> to vector<8x256xf32>
    %27 = arith.addf %24, %26 : vector<8x256xf32>
    %c0_18 = arith.constant 0 : index
    %c0_19 = arith.constant 0 : index
    %28 = vector.load %arg6[%c0_18, %c0_19] : memref<8x4xbf16, #tpu.memory_space<vmem>>, vector<8x4xbf16>
    %cst_20 = arith.constant dense<0.000000e+00> : vector<8x256xf32>
    %29 = tpu.matmul %28, %18, %cst_20 {dimension_numbers = #tpu.dot_dimension_numbers<[1], [0], [0], [1], [0, 0, 1, 1], [], []>} : vector<8x4xbf16>, vector<4x256xbf16>, vector<8x256xf32> -> vector<8x256xf32>
    %c0_21 = arith.constant 0 : index
    %c0_22 = arith.constant 0 : index
    %30 = vector.load %arg7[%c0_21, %c0_22] : memref<8x1xbf16, #tpu.memory_space<vmem>>, vector<8x1xbf16>
    %cst_23 = arith.constant dense<0.000000e+00> : vector<8x256xf32>
    %31 = tpu.matmul %30, %20, %cst_23 {dimension_numbers = #tpu.dot_dimension_numbers<[1], [0], [0], [1], [0, 0, 1, 1], [], []>} : vector<8x1xbf16>, vector<1x256xbf16>, vector<8x256xf32> -> vector<8x256xf32>
    %32 = arith.addf %29, %31 : vector<8x256xf32>
    %c0_24 = arith.constant 0 : index
    %c0_25 = arith.constant 0 : index
    %33 = vector.load %arg8[%c0_24, %c0_25] : memref<8x1xf32, #tpu.memory_space<vmem>>, vector<8x1xf32>
    %34 = vector.broadcast %33 : vector<8x1xf32> to vector<8x256xf32>
    %35 = arith.addf %32, %34 : vector<8x256xf32>
    %cst_26 = arith.constant 0.000000e+00 : f32
    %36 = vector.broadcast %cst_26 : f32 to vector<8x256xf32>
    %37 = arith.cmpf oge, %35, %36 : vector<8x256xf32>
    %cst_27 = arith.constant 2.000000e-01 : f32
    %38 = vector.broadcast %cst_27 : f32 to vector<8x256xf32>
    %39 = arith.mulf %38, %35 : vector<8x256xf32>
    %40 = arith.select %37, %35, %39 : vector<8x256xi1>, vector<8x256xf32>
    %41 = arith.truncf %40 : vector<8x256xf32> to vector<8x256xbf16>
    %c0_28 = arith.constant 0 : index
    %c128 = arith.constant 128 : index
    %42 = vector.load %arg16[%c0_28, %c128] : memref<8x512xbf16, #tpu.memory_space<vmem>>, vector<8x256xbf16>
    tpu.vector_store %arg16[%c0_28, %c128], %41 {strides = array<i32>} : memref<8x512xbf16, #tpu.memory_space<vmem>>, vector<8x256xbf16>,
    %c0_29 = arith.constant 0 : index
    %c111 = arith.constant 111 : index
    %43 = vector.load %arg16[%c0_29, %c111] : memref<8x512xbf16, #tpu.memory_space<vmem>>, vector<8x256xbf16>
    %44 = vector.broadcast %11 : vector<1x256xbf16> to vector<8x256xbf16>
    %45 = arith.mulf %43, %44 : vector<8x256xbf16>
    %c0_30 = arith.constant 0 : index
    %c0_31 = arith.constant 0 : index
    %c0_32 = arith.constant 0 : index
    %46 = vector.load %arg9[%c0_30, %c0_31, %c0_32] : memref<9x8x8xbf16, #tpu.memory_space<vmem>>, vector<1x8x8xbf16>
    %47 = vector.shape_cast %46 : vector<1x8x8xbf16> to vector<8x8xbf16>
    %cst_33 = arith.constant dense<0.000000e+00> : vector<8x256xf32>
    %48 = tpu.matmul %47, %45, %cst_33 {dimension_numbers = #tpu.dot_dimension_numbers<[1], [0], [0], [1], [0, 0, 1, 1], [], []>} : vector<8x8xbf16>, vector<8x256xbf16>, vector<8x256xf32> -> vector<8x256xf32>
    %c0_34 = arith.constant 0 : index
    %c112 = arith.constant 112 : index
    %49 = vector.load %arg16[%c0_34, %c112] : memref<8x512xbf16, #tpu.memory_space<vmem>>, vector<8x256xbf16>
    %c1 = arith.constant 1 : index
    %c0_35 = arith.constant 0 : index
    %c0_36 = arith.constant 0 : index
    %50 = vector.load %arg9[%c1, %c0_35, %c0_36] : memref<9x8x8xbf16, #tpu.memory_space<vmem>>, vector<1x8x8xbf16>
    %51 = vector.shape_cast %50 : vector<1x8x8xbf16> to vector<8x8xbf16>
    %cst_37 = arith.constant dense<0.000000e+00> : vector<8x256xf32>
    %52 = tpu.matmul %51, %49, %cst_37 {dimension_numbers = #tpu.dot_dimension_numbers<[1], [0], [0], [1], [0, 0, 1, 1], [], []>} : vector<8x8xbf16>, vector<8x256xbf16>, vector<8x256xf32> -> vector<8x256xf32>
    %53 = arith.addf %48, %52 : vector<8x256xf32>
    %c0_38 = arith.constant 0 : index
    %c113 = arith.constant 113 : index
    %54 = vector.load %arg16[%c0_38, %c113] : memref<8x512xbf16, #tpu.memory_space<vmem>>, vector<8x256xbf16>
    %55 = vector.broadcast %16 : vector<1x256xbf16> to vector<8x256xbf16>
    %56 = arith.mulf %54, %55 : vector<8x256xbf16>
    %c2 = arith.constant 2 : index
    %c0_39 = arith.constant 0 : index
    %c0_40 = arith.constant 0 : index
    %57 = vector.load %arg9[%c2, %c0_39, %c0_40] : memref<9x8x8xbf16, #tpu.memory_space<vmem>>, vector<1x8x8xbf16>
    %58 = vector.shape_cast %57 : vector<1x8x8xbf16> to vector<8x8xbf16>
    %cst_41 = arith.constant dense<0.000000e+00> : vector<8x256xf32>
    %59 = tpu.matmul %58, %56, %cst_41 {dimension_numbers = #tpu.dot_dimension_numbers<[1], [0], [0], [1], [0, 0, 1, 1], [], []>} : vector<8x8xbf16>, vector<8x256xbf16>, vector<8x256xf32> -> vector<8x256xf32>
    %60 = arith.addf %53, %59 : vector<8x256xf32>
    %c0_42 = arith.constant 0 : index
    %c127 = arith.constant 127 : index
    %61 = vector.load %arg16[%c0_42, %c127] : memref<8x512xbf16, #tpu.memory_space<vmem>>, vector<8x256xbf16>
    %62 = vector.broadcast %11 : vector<1x256xbf16> to vector<8x256xbf16>
    %63 = arith.mulf %61, %62 : vector<8x256xbf16>
    %c3 = arith.constant 3 : index
    %c0_43 = arith.constant 0 : index
    %c0_44 = arith.constant 0 : index
    %64 = vector.load %arg9[%c3, %c0_43, %c0_44] : memref<9x8x8xbf16, #tpu.memory_space<vmem>>, vector<1x8x8xbf16>
    %65 = vector.shape_cast %64 : vector<1x8x8xbf16> to vector<8x8xbf16>
    %cst_45 = arith.constant dense<0.000000e+00> : vector<8x256xf32>
    %66 = tpu.matmul %65, %63, %cst_45 {dimension_numbers = #tpu.dot_dimension_numbers<[1], [0], [0], [1], [0, 0, 1, 1], [], []>} : vector<8x8xbf16>, vector<8x256xbf16>, vector<8x256xf32> -> vector<8x256xf32>
    %67 = arith.addf %60, %66 : vector<8x256xf32>
    %c0_46 = arith.constant 0 : index
    %c128_47 = arith.constant 128 : index
    %68 = vector.load %arg16[%c0_46, %c128_47] : memref<8x512xbf16, #tpu.memory_space<vmem>>, vector<8x256xbf16>
    %c4 = arith.constant 4 : index
    %c0_48 = arith.constant 0 : index
    %c0_49 = arith.constant 0 : index
    %69 = vector.load %arg9[%c4, %c0_48, %c0_49] : memref<9x8x8xbf16, #tpu.memory_space<vmem>>, vector<1x8x8xbf16>
    %70 = vector.shape_cast %69 : vector<1x8x8xbf16> to vector<8x8xbf16>
    %cst_50 = arith.constant dense<0.000000e+00> : vector<8x256xf32>
    %71 = tpu.matmul %70, %68, %cst_50 {dimension_numbers = #tpu.dot_dimension_numbers<[1], [0], [0], [1], [0, 0, 1, 1], [], []>} : vector<8x8xbf16>, vector<8x256xbf16>, vector<8x256xf32> -> vector<8x256xf32>
    %72 = arith.addf %67, %71 : vector<8x256xf32>
    %c0_51 = arith.constant 0 : index
    %c129 = arith.constant 129 : index
    %73 = vector.load %arg16[%c0_51, %c129] : memref<8x512xbf16, #tpu.memory_space<vmem>>, vector<8x256xbf16>
    %74 = vector.broadcast %16 : vector<1x256xbf16> to vector<8x256xbf16>
    %75 = arith.mulf %73, %74 : vector<8x256xbf16>
    %c5 = arith.constant 5 : index
    %c0_52 = arith.constant 0 : index
    %c0_53 = arith.constant 0 : index
    %76 = vector.load %arg9[%c5, %c0_52, %c0_53] : memref<9x8x8xbf16, #tpu.memory_space<vmem>>, vector<1x8x8xbf16>
    %77 = vector.shape_cast %76 : vector<1x8x8xbf16> to vector<8x8xbf16>
    %cst_54 = arith.constant dense<0.000000e+00> : vector<8x256xf32>
    %78 = tpu.matmul %77, %75, %cst_54 {dimension_numbers = #tpu.dot_dimension_numbers<[1], [0], [0], [1], [0, 0, 1, 1], [], []>} : vector<8x8xbf16>, vector<8x256xbf16>, vector<8x256xf32> -> vector<8x256xf32>
    %79 = arith.addf %72, %78 : vector<8x256xf32>
    %c0_55 = arith.constant 0 : index
    %c143 = arith.constant 143 : index
    %80 = vector.load %arg16[%c0_55, %c143] : memref<8x512xbf16, #tpu.memory_space<vmem>>, vector<8x256xbf16>
    %81 = vector.broadcast %11 : vector<1x256xbf16> to vector<8x256xbf16>
    %82 = arith.mulf %80, %81 : vector<8x256xbf16>
    %c6 = arith.constant 6 : index
    %c0_56 = arith.constant 0 : index
    %c0_57 = arith.constant 0 : index
    %83 = vector.load %arg9[%c6, %c0_56, %c0_57] : memref<9x8x8xbf16, #tpu.memory_space<vmem>>, vector<1x8x8xbf16>
    %84 = vector.shape_cast %83 : vector<1x8x8xbf16> to vector<8x8xbf16>
    %cst_58 = arith.constant dense<0.000000e+00> : vector<8x256xf32>
    %85 = tpu.matmul %84, %82, %cst_58 {dimension_numbers = #tpu.dot_dimension_numbers<[1], [0], [0], [1], [0, 0, 1, 1], [], []>} : vector<8x8xbf16>, vector<8x256xbf16>, vector<8x256xf32> -> vector<8x256xf32>
    %86 = arith.addf %79, %85 : vector<8x256xf32>
    %c0_59 = arith.constant 0 : index
    %c144 = arith.constant 144 : index
    %87 = vector.load %arg16[%c0_59, %c144] : memref<8x512xbf16, #tpu.memory_space<vmem>>, vector<8x256xbf16>
    %c7 = arith.constant 7 : index
    %c0_60 = arith.constant 0 : index
    %c0_61 = arith.constant 0 : index
    %88 = vector.load %arg9[%c7, %c0_60, %c0_61] : memref<9x8x8xbf16, #tpu.memory_space<vmem>>, vector<1x8x8xbf16>
    %89 = vector.shape_cast %88 : vector<1x8x8xbf16> to vector<8x8xbf16>
    %cst_62 = arith.constant dense<0.000000e+00> : vector<8x256xf32>
    %90 = tpu.matmul %89, %87, %cst_62 {dimension_numbers = #tpu.dot_dimension_numbers<[1], [0], [0], [1], [0, 0, 1, 1], [], []>} : vector<8x8xbf16>, vector<8x256xbf16>, vector<8x256xf32> -> vector<8x256xf32>
    %91 = arith.addf %86, %90 : vector<8x256xf32>
    %c0_63 = arith.constant 0 : index
    %c145 = arith.constant 145 : index
    %92 = vector.load %arg16[%c0_63, %c145] : memref<8x512xbf16, #tpu.memory_space<vmem>>, vector<8x256xbf16>
    %93 = vector.broadcast %16 : vector<1x256xbf16> to vector<8x256xbf16>
    %94 = arith.mulf %92, %93 : vector<8x256xbf16>
    %c8 = arith.constant 8 : index
    %c0_64 = arith.constant 0 : index
    %c0_65 = arith.constant 0 : index
    %95 = vector.load %arg9[%c8, %c0_64, %c0_65] : memref<9x8x8xbf16, #tpu.memory_space<vmem>>, vector<1x8x8xbf16>
    %96 = vector.shape_cast %95 : vector<1x8x8xbf16> to vector<8x8xbf16>
    %cst_66 = arith.constant dense<0.000000e+00> : vector<8x256xf32>
    %97 = tpu.matmul %96, %94, %cst_66 {dimension_numbers = #tpu.dot_dimension_numbers<[1], [0], [0], [1], [0, 0, 1, 1], [], []>} : vector<8x8xbf16>, vector<8x256xbf16>, vector<8x256xf32> -> vector<8x256xf32>
    %98 = arith.addf %91, %97 : vector<8x256xf32>
    %c0_67 = arith.constant 0 : index
    %c0_68 = arith.constant 0 : index
    %99 = vector.load %arg10[%c0_67, %c0_68] : memref<8x1xf32, #tpu.memory_space<vmem>>, vector<8x1xf32>
    %100 = vector.broadcast %99 : vector<8x1xf32> to vector<8x256xf32>
    %101 = arith.addf %98, %100 : vector<8x256xf32>
    %cst_69 = arith.constant 0.000000e+00 : f32
    %102 = vector.broadcast %cst_69 : f32 to vector<8x256xf32>
    %103 = arith.cmpf oge, %101, %102 : vector<8x256xf32>
    %cst_70 = arith.constant 2.000000e-01 : f32
    %104 = vector.broadcast %cst_70 : f32 to vector<8x256xf32>
    %105 = arith.mulf %104, %101 : vector<8x256xf32>
    %106 = arith.select %103, %101, %105 : vector<8x256xi1>, vector<8x256xf32>
    %c0_71 = arith.constant 0 : index
    %c0_72 = arith.constant 0 : index
    %107 = vector.load %arg11[%c0_71, %c0_72] : memref<8x8xf32, #tpu.memory_space<vmem>>, vector<8x8xf32>
    %108 = vector.broadcast %22 : vector<1x8xf32> to vector<8x8xf32>
    %109 = arith.mulf %107, %108 : vector<8x8xf32>
    %cst_73 = arith.constant dense<0.000000e+00> : vector<8xf32>
    %110 = vector.multi_reduction <add>, %109, %cst_73 [1] : vector<8x8xf32> to vector<8xf32>
    %111 = vector.shape_cast %110 : vector<8xf32> to vector<8x1xf32>
    %c0_74 = arith.constant 0 : index
    %c0_75 = arith.constant 0 : index
    %112 = vector.load %arg12[%c0_74, %c0_75] : memref<8x1xf32, #tpu.memory_space<vmem>>, vector<8x1xf32>
    %113 = arith.addf %111, %112 : vector<8x1xf32>
    %cst_76 = arith.constant 0.117851131 : f32
    %114 = vector.broadcast %cst_76 : f32 to vector<8x1xf32>
    %115 = arith.mulf %113, %114 : vector<8x1xf32>
    %c0_77 = arith.constant 0 : index
    %c0_78 = arith.constant 0 : index
    %116 = vector.load %arg14[%c0_77, %c0_78] : memref<8x8xf32, #tpu.memory_space<vmem>>, vector<8x8xf32>
    %117 = arith.mulf %115, %115 : vector<8x1xf32>
    %cst_79 = arith.constant dense<0.000000e+00> : vector<8x1xf32>
    %118 = tpu.matmul %116, %117, %cst_79 {dimension_numbers = #tpu.dot_dimension_numbers<[1], [0], [0], [1], [0, 0, 1, 1], [], []>} : vector<8x8xf32>, vector<8x1xf32>, vector<8x1xf32> -> vector<8x1xf32>
    %cst_80 = arith.constant 9.99999993E-9 : f32
    %119 = vector.broadcast %cst_80 : f32 to vector<8x1xf32>
    %120 = arith.addf %118, %119 : vector<8x1xf32>
    %121 = math.rsqrt %120 : vector<8x1xf32>
    %122 = vector.broadcast %115 : vector<8x1xf32> to vector<8x256xf32>
    %123 = arith.mulf %106, %122 : vector<8x256xf32>
    %124 = arith.truncf %123 : vector<8x256xf32> to vector<8x256xbf16>
    %c0_81 = arith.constant 0 : index
    %c128_82 = arith.constant 128 : index
    %125 = vector.load %arg16[%c0_81, %c128_82] : memref<8x512xbf16, #tpu.memory_space<vmem>>, vector<8x256xbf16>
    tpu.vector_store %arg16[%c0_81, %c128_82], %124 {strides = array<i32>} : memref<8x512xbf16, #tpu.memory_space<vmem>>, vector<8x256xbf16>,
    %c0_83 = arith.constant 0 : index
    %c111_84 = arith.constant 111 : index
    %126 = vector.load %arg16[%c0_83, %c111_84] : memref<8x512xbf16, #tpu.memory_space<vmem>>, vector<8x256xbf16>
    %127 = vector.broadcast %11 : vector<1x256xbf16> to vector<8x256xbf16>
    %128 = arith.mulf %126, %127 : vector<8x256xbf16>
    %c0_85 = arith.constant 0 : index
    %c0_86 = arith.constant 0 : index
    %c0_87 = arith.constant 0 : index
    %129 = vector.load %arg13[%c0_85, %c0_86, %c0_87] : memref<9x8x8xbf16, #tpu.memory_space<vmem>>, vector<1x8x8xbf16>
    %130 = vector.shape_cast %129 : vector<1x8x8xbf16> to vector<8x8xbf16>
    %cst_88 = arith.constant dense<0.000000e+00> : vector<8x256xf32>
    %131 = tpu.matmul %130, %128, %cst_88 {dimension_numbers = #tpu.dot_dimension_numbers<[1], [0], [0], [1], [0, 0, 1, 1], [], []>} : vector<8x8xbf16>, vector<8x256xbf16>, vector<8x256xf32> -> vector<8x256xf32>
    %c0_89 = arith.constant 0 : index
    %c112_90 = arith.constant 112 : index
    %132 = vector.load %arg16[%c0_89, %c112_90] : memref<8x512xbf16, #tpu.memory_space<vmem>>, vector<8x256xbf16>
    %c1_91 = arith.constant 1 : index
    %c0_92 = arith.constant 0 : index
    %c0_93 = arith.constant 0 : index
    %133 = vector.load %arg13[%c1_91, %c0_92, %c0_93] : memref<9x8x8xbf16, #tpu.memory_space<vmem>>, vector<1x8x8xbf16>
    %134 = vector.shape_cast %133 : vector<1x8x8xbf16> to vector<8x8xbf16>
    %cst_94 = arith.constant dense<0.000000e+00> : vector<8x256xf32>
    %135 = tpu.matmul %134, %132, %cst_94 {dimension_numbers = #tpu.dot_dimension_numbers<[1], [0], [0], [1], [0, 0, 1, 1], [], []>} : vector<8x8xbf16>, vector<8x256xbf16>, vector<8x256xf32> -> vector<8x256xf32>
    %136 = arith.addf %131, %135 : vector<8x256xf32>
    %c0_95 = arith.constant 0 : index
    %c113_96 = arith.constant 113 : index
    %137 = vector.load %arg16[%c0_95, %c113_96] : memref<8x512xbf16, #tpu.memory_space<vmem>>, vector<8x256xbf16>
    %138 = vector.broadcast %16 : vector<1x256xbf16> to vector<8x256xbf16>
    %139 = arith.mulf %137, %138 : vector<8x256xbf16>
    %c2_97 = arith.constant 2 : index
    %c0_98 = arith.constant 0 : index
    %c0_99 = arith.constant 0 : index
    %140 = vector.load %arg13[%c2_97, %c0_98, %c0_99] : memref<9x8x8xbf16, #tpu.memory_space<vmem>>, vector<1x8x8xbf16>
    %141 = vector.shape_cast %140 : vector<1x8x8xbf16> to vector<8x8xbf16>
    %cst_100 = arith.constant dense<0.000000e+00> : vector<8x256xf32>
    %142 = tpu.matmul %141, %139, %cst_100 {dimension_numbers = #tpu.dot_dimension_numbers<[1], [0], [0], [1], [0, 0, 1, 1], [], []>} : vector<8x8xbf16>, vector<8x256xbf16>, vector<8x256xf32> -> vector<8x256xf32>
    %143 = arith.addf %136, %142 : vector<8x256xf32>
    %c0_101 = arith.constant 0 : index
    %c127_102 = arith.constant 127 : index
    %144 = vector.load %arg16[%c0_101, %c127_102] : memref<8x512xbf16, #tpu.memory_space<vmem>>, vector<8x256xbf16>
    %145 = vector.broadcast %11 : vector<1x256xbf16> to vector<8x256xbf16>
    %146 = arith.mulf %144, %145 : vector<8x256xbf16>
    %c3_103 = arith.constant 3 : index
    %c0_104 = arith.constant 0 : index
    %c0_105 = arith.constant 0 : index
    %147 = vector.load %arg13[%c3_103, %c0_104, %c0_105] : memref<9x8x8xbf16, #tpu.memory_space<vmem>>, vector<1x8x8xbf16>
    %148 = vector.shape_cast %147 : vector<1x8x8xbf16> to vector<8x8xbf16>
    %cst_106 = arith.constant dense<0.000000e+00> : vector<8x256xf32>
    %149 = tpu.matmul %148, %146, %cst_106 {dimension_numbers = #tpu.dot_dimension_numbers<[1], [0], [0], [1], [0, 0, 1, 1], [], []>} : vector<8x8xbf16>, vector<8x256xbf16>, vector<8x256xf32> -> vector<8x256xf32>
    %150 = arith.addf %143, %149 : vector<8x256xf32>
    %c0_107 = arith.constant 0 : index
    %c128_108 = arith.constant 128 : index
    %151 = vector.load %arg16[%c0_107, %c128_108] : memref<8x512xbf16, #tpu.memory_space<vmem>>, vector<8x256xbf16>
    %c4_109 = arith.constant 4 : index
    %c0_110 = arith.constant 0 : index
    %c0_111 = arith.constant 0 : index
    %152 = vector.load %arg13[%c4_109, %c0_110, %c0_111] : memref<9x8x8xbf16, #tpu.memory_space<vmem>>, vector<1x8x8xbf16>
    %153 = vector.shape_cast %152 : vector<1x8x8xbf16> to vector<8x8xbf16>
    %cst_112 = arith.constant dense<0.000000e+00> : vector<8x256xf32>
    %154 = tpu.matmul %153, %151, %cst_112 {dimension_numbers = #tpu.dot_dimension_numbers<[1], [0], [0], [1], [0, 0, 1, 1], [], []>} : vector<8x8xbf16>, vector<8x256xbf16>, vector<8x256xf32> -> vector<8x256xf32>
    %155 = arith.addf %150, %154 : vector<8x256xf32>
    %c0_113 = arith.constant 0 : index
    %c129_114 = arith.constant 129 : index
    %156 = vector.load %arg16[%c0_113, %c129_114] : memref<8x512xbf16, #tpu.memory_space<vmem>>, vector<8x256xbf16>
    %157 = vector.broadcast %16 : vector<1x256xbf16> to vector<8x256xbf16>
    %158 = arith.mulf %156, %157 : vector<8x256xbf16>
    %c5_115 = arith.constant 5 : index
    %c0_116 = arith.constant 0 : index
    %c0_117 = arith.constant 0 : index
    %159 = vector.load %arg13[%c5_115, %c0_116, %c0_117] : memref<9x8x8xbf16, #tpu.memory_space<vmem>>, vector<1x8x8xbf16>
    %160 = vector.shape_cast %159 : vector<1x8x8xbf16> to vector<8x8xbf16>
    %cst_118 = arith.constant dense<0.000000e+00> : vector<8x256xf32>
    %161 = tpu.matmul %160, %158, %cst_118 {dimension_numbers = #tpu.dot_dimension_numbers<[1], [0], [0], [1], [0, 0, 1, 1], [], []>} : vector<8x8xbf16>, vector<8x256xbf16>, vector<8x256xf32> -> vector<8x256xf32>
    %162 = arith.addf %155, %161 : vector<8x256xf32>
    %c0_119 = arith.constant 0 : index
    %c143_120 = arith.constant 143 : index
    %163 = vector.load %arg16[%c0_119, %c143_120] : memref<8x512xbf16, #tpu.memory_space<vmem>>, vector<8x256xbf16>
    %164 = vector.broadcast %11 : vector<1x256xbf16> to vector<8x256xbf16>
    %165 = arith.mulf %163, %164 : vector<8x256xbf16>
    %c6_121 = arith.constant 6 : index
    %c0_122 = arith.constant 0 : index
    %c0_123 = arith.constant 0 : index
    %166 = vector.load %arg13[%c6_121, %c0_122, %c0_123] : memref<9x8x8xbf16, #tpu.memory_space<vmem>>, vector<1x8x8xbf16>
    %167 = vector.shape_cast %166 : vector<1x8x8xbf16> to vector<8x8xbf16>
    %cst_124 = arith.constant dense<0.000000e+00> : vector<8x256xf32>
    %168 = tpu.matmul %167, %165, %cst_124 {dimension_numbers = #tpu.dot_dimension_numbers<[1], [0], [0], [1], [0, 0, 1, 1], [], []>} : vector<8x8xbf16>, vector<8x256xbf16>, vector<8x256xf32> -> vector<8x256xf32>
    %169 = arith.addf %162, %168 : vector<8x256xf32>
    %c0_125 = arith.constant 0 : index
    %c144_126 = arith.constant 144 : index
    %170 = vector.load %arg16[%c0_125, %c144_126] : memref<8x512xbf16, #tpu.memory_space<vmem>>, vector<8x256xbf16>
    %c7_127 = arith.constant 7 : index
    %c0_128 = arith.constant 0 : index
    %c0_129 = arith.constant 0 : index
    %171 = vector.load %arg13[%c7_127, %c0_128, %c0_129] : memref<9x8x8xbf16, #tpu.memory_space<vmem>>, vector<1x8x8xbf16>
    %172 = vector.shape_cast %171 : vector<1x8x8xbf16> to vector<8x8xbf16>
    %cst_130 = arith.constant dense<0.000000e+00> : vector<8x256xf32>
    %173 = tpu.matmul %172, %170, %cst_130 {dimension_numbers = #tpu.dot_dimension_numbers<[1], [0], [0], [1], [0, 0, 1, 1], [], []>} : vector<8x8xbf16>, vector<8x256xbf16>, vector<8x256xf32> -> vector<8x256xf32>
    %174 = arith.addf %169, %173 : vector<8x256xf32>
    %c0_131 = arith.constant 0 : index
    %c145_132 = arith.constant 145 : index
    %175 = vector.load %arg16[%c0_131, %c145_132] : memref<8x512xbf16, #tpu.memory_space<vmem>>, vector<8x256xbf16>
    %176 = vector.broadcast %16 : vector<1x256xbf16> to vector<8x256xbf16>
    %177 = arith.mulf %175, %176 : vector<8x256xbf16>
    %c8_133 = arith.constant 8 : index
    %c0_134 = arith.constant 0 : index
    %c0_135 = arith.constant 0 : index
    %178 = vector.load %arg13[%c8_133, %c0_134, %c0_135] : memref<9x8x8xbf16, #tpu.memory_space<vmem>>, vector<1x8x8xbf16>
    %179 = vector.shape_cast %178 : vector<1x8x8xbf16> to vector<8x8xbf16>
    %cst_136 = arith.constant dense<0.000000e+00> : vector<8x256xf32>
    %180 = tpu.matmul %179, %177, %cst_136 {dimension_numbers = #tpu.dot_dimension_numbers<[1], [0], [0], [1], [0, 0, 1, 1], [], []>} : vector<8x8xbf16>, vector<8x256xbf16>, vector<8x256xf32> -> vector<8x256xf32>
    %181 = arith.addf %174, %180 : vector<8x256xf32>
    %182 = vector.broadcast %121 : vector<8x1xf32> to vector<8x256xf32>
    %183 = arith.mulf %181, %182 : vector<8x256xf32>
    %184 = arith.addf %183, %27 : vector<8x256xf32>
    %c0_137 = arith.constant 0 : index
    %c0_138 = arith.constant 0 : index
    %c0_139 = arith.constant 0 : index
    %185 = vector.load %arg15[%c0_137, %c0_138, %c0_139] : memref<1x8x256xf32, #tpu.memory_space<vmem>>, vector<1x8x256xf32>
    %186 = vector.shape_cast %185 : vector<1x8x256xf32> to vector<8x256xf32>
    %187 = vector.shape_cast %184 : vector<8x256xf32> to vector<1x8x256xf32>
    tpu.vector_store %arg15[%c0_137, %c0_138, %c0_139], %187 {strides = array<i32>} : memref<1x8x256xf32, #tpu.memory_space<vmem>>, vector<1x8x256xf32>,
    return
  }
  func.func @transform_0(%arg0: i32) -> (i32, i32, i32) {
    %c0_i32 = arith.constant 0 : i32
    %c0_i32_0 = arith.constant 0 : i32
    %c0_i32_1 = arith.constant 0 : i32
    return %arg0, %c0_i32, %c0_i32_0 : i32, i32, i32
  }
  func.func @transform_1(%arg0: i32) -> (i32, i32, i32) {
    %c0_i32 = arith.constant 0 : i32
    %c0_i32_0 = arith.constant 0 : i32
    %c0_i32_1 = arith.constant 0 : i32
    return %arg0, %c0_i32, %c0_i32_0 : i32, i32, i32
  }
  func.func @transform_2(%arg0: i32) -> (i32, i32, i32) {
    %c0_i32 = arith.constant 0 : i32
    %c0_i32_0 = arith.constant 0 : i32
    %c0_i32_1 = arith.constant 0 : i32
    return %arg0, %c0_i32, %c0_i32_0 : i32, i32, i32
  }
  func.func @transform_3(%arg0: i32) -> (i32, i32) {
    %c0_i32 = arith.constant 0 : i32
    %c0_i32_0 = arith.constant 0 : i32
    %c0_i32_1 = arith.constant 0 : i32
    return %c0_i32, %c0_i32_0 : i32, i32
  }
  func.func @transform_4(%arg0: i32) -> (i32, i32) {
    %c0_i32 = arith.constant 0 : i32
    %c0_i32_0 = arith.constant 0 : i32
    %c0_i32_1 = arith.constant 0 : i32
    return %c0_i32, %c0_i32_0 : i32, i32
  }
  func.func @transform_5(%arg0: i32) -> (i32, i32) {
    %c0_i32 = arith.constant 0 : i32
    %c0_i32_0 = arith.constant 0 : i32
    %c0_i32_1 = arith.constant 0 : i32
    return %c0_i32, %c0_i32_0 : i32, i32
  }
  func.func @transform_6(%arg0: i32) -> (i32, i32) {
    %c0_i32 = arith.constant 0 : i32
    %c0_i32_0 = arith.constant 0 : i32
    %c0_i32_1 = arith.constant 0 : i32
    return %c0_i32, %c0_i32_0 : i32, i32
  }
  func.func @transform_7(%arg0: i32) -> (i32, i32) {
    %c0_i32 = arith.constant 0 : i32
    %c0_i32_0 = arith.constant 0 : i32
    %c0_i32_1 = arith.constant 0 : i32
    return %c0_i32, %c0_i32_0 : i32, i32
  }
  func.func @transform_8(%arg0: i32) -> (i32, i32, i32) {
    %c0_i32 = arith.constant 0 : i32
    %c0_i32_0 = arith.constant 0 : i32
    %c0_i32_1 = arith.constant 0 : i32
    %c0_i32_2 = arith.constant 0 : i32
    return %c0_i32, %c0_i32_0, %c0_i32_1 : i32, i32, i32
  }
  func.func @transform_9(%arg0: i32) -> (i32, i32) {
    %c0_i32 = arith.constant 0 : i32
    %c0_i32_0 = arith.constant 0 : i32
    %c0_i32_1 = arith.constant 0 : i32
    return %c0_i32, %c0_i32_0 : i32, i32
  }
  func.func @transform_10(%arg0: i32) -> (i32, i32) {
    %c0_i32 = arith.constant 0 : i32
    %c0_i32_0 = arith.constant 0 : i32
    %c0_i32_1 = arith.constant 0 : i32
    return %c0_i32, %c0_i32_0 : i32, i32
  }
  func.func @transform_11(%arg0: i32) -> (i32, i32) {
    %c0_i32 = arith.constant 0 : i32
    %c0_i32_0 = arith.constant 0 : i32
    %c0_i32_1 = arith.constant 0 : i32
    return %c0_i32, %c0_i32_0 : i32, i32
  }
  func.func @transform_12(%arg0: i32) -> (i32, i32, i32) {
    %c0_i32 = arith.constant 0 : i32
    %c0_i32_0 = arith.constant 0 : i32
    %c0_i32_1 = arith.constant 0 : i32
    %c0_i32_2 = arith.constant 0 : i32
    return %c0_i32, %c0_i32_0, %c0_i32_1 : i32, i32, i32
  }
  func.func @transform_13(%arg0: i32) -> (i32, i32) {
    %c0_i32 = arith.constant 0 : i32
    %c0_i32_0 = arith.constant 0 : i32
    %c0_i32_1 = arith.constant 0 : i32
    return %c0_i32, %c0_i32_0 : i32, i32
  }
  func.func @transform_14(%arg0: i32) -> (i32, i32, i32) {
    %c0_i32 = arith.constant 0 : i32
    %c0_i32_0 = arith.constant 0 : i32
    %c0_i32_1 = arith.constant 0 : i32
    return %arg0, %c0_i32, %c0_i32_0 : i32, i32, i32
  }
}

</mosaic_0001>

<llo_original>
// kernel: up_block_forward.1
$region0: #{up_block_forward.1}
  #allocation0 [shape = 'u32[]', space=smem, size = 0x4, offset = 0x4, fixed_abs, tag = 'smem constant byte address 0x4 - core index']
  #allocation1 [shape = 'u32[144,128]{1,0:T(1,128)}', space=vmem, size = 0x12000, scoped, tag = 'internal scratch']
  #allocation2 [shape = 'bf16[8,512]{1,0:T(8,128)(2,1)}', space=vmem, size = 0x2000, scoped, tag = 'scratch operand']
  %s0 = inlined_call_operand.vmem [shape: bf16[2,4,256], index: 0, kind: input, shape index: {}]
  %s1 = inlined_call_operand.vmem [shape: bf16[2,1,256], index: 1, kind: input, shape index: {}]
  %s2 = inlined_call_operand.vmem [shape: f32[2,1,8], index: 2, kind: input, shape index: {}]
  %s3 = inlined_call_operand.vmem [shape: bf16[8,4], index: 3, kind: input, shape index: {}]
  %s4 = inlined_call_operand.vmem [shape: f32[8,1], index: 4, kind: input, shape index: {}]
  %s5 = inlined_call_operand.vmem [shape: bf16[8,4], index: 5, kind: input, shape index: {}]
  %s6 = inlined_call_operand.vmem [shape: bf16[8,1], index: 6, kind: input, shape index: {}]
  %s7 = inlined_call_operand.vmem [shape: f32[8,1], index: 7, kind: input, shape index: {}]
  %s8 = inlined_call_operand.vmem [shape: bf16[9,8,8], index: 8, kind: input, shape index: {}]
  %s9 = inlined_call_operand.vmem [shape: f32[8,1], index: 9, kind: input, shape index: {}]
  %s10 = inlined_call_operand.vmem [shape: f32[8,8], index: 10, kind: input, shape index: {}]
  %s11 = inlined_call_operand.vmem [shape: f32[8,1], index: 11, kind: input, shape index: {}]
  %s12 = inlined_call_operand.vmem [shape: bf16[9,8,8], index: 12, kind: input, shape index: {}]
  %s13 = inlined_call_operand.vmem [shape: f32[8,8], index: 13, kind: input, shape index: {}]
  %s14 = inlined_call_operand.vmem [shape: f32[2,8,256], index: 14, kind: output, shape index: {}]
  %s15 = sld [smem:[#allocation0]]
  $region89: #{up_block_forward.1} parent=0
    _
  %s17 = ssub.s32 1, %s15
  %s18 = scalar_select 0, %s17, %s15
  loop: start=0, step=1, limit=4
  $region2: #{up_block_forward.1} parent=0 // loop_pre_header
    _
  $region3: #{up_block_forward.1} parent=0 // loop_header
    %s20 = sphi 0, %s24
    %p21 = scmp.ge.s32.totalorder %s20, 4
    %s30 = sphi 0, %s32
    %s33 = sphi 0, %s30
    %s34 = sphi 0, %s33
    %s50 = sphi 0, %s34
    %s56 = sphi 0, %s58
    %s59 = sphi 0, %s56
    %s60 = sphi 0, %s59
    %s76 = sphi 0, %s60
    %s82 = sphi 0, %s84
    %s85 = sphi 0, %s82
    %s86 = sphi 0, %s85
    %s102 = sphi 0, %s86
    %s106 = sphi 0, %s106
    %s108 = sphi 0, %s106
    %s109 = sphi 0, %s108
    %s123 = sphi 0, %s109
    %s127 = sphi 0, %s127
    %s129 = sphi 0, %s127
    %s130 = sphi 0, %s129
    %s144 = sphi 0, %s130
    %s148 = sphi 0, %s148
    %s150 = sphi 0, %s148
    %s151 = sphi 0, %s150
    %s165 = sphi 0, %s151
    %s169 = sphi 0, %s169
    %s171 = sphi 0, %s169
    %s172 = sphi 0, %s171
    %s186 = sphi 0, %s172
    %s190 = sphi 0, %s190
    %s192 = sphi 0, %s190
    %s193 = sphi 0, %s192
    %s207 = sphi 0, %s193
    %s211 = sphi 0, %s211
    %s213 = sphi 0, %s211
    %s214 = sphi 0, %s213
    %s228 = sphi 0, %s214
    %s232 = sphi 0, %s232
    %s234 = sphi 0, %s232
    %s235 = sphi 0, %s234
    %s249 = sphi 0, %s235
    %s253 = sphi 0, %s253
    %s255 = sphi 0, %s253
    %s256 = sphi 0, %s255
    %s270 = sphi 0, %s256
    %s274 = sphi 0, %s274
    %s276 = sphi 0, %s274
    %s277 = sphi 0, %s276
    %s291 = sphi 0, %s277
    %s295 = sphi 0, %s295
    %s297 = sphi 0, %s295
    %s298 = sphi 0, %s297
    %s312 = sphi 0, %s298
    %s316 = sphi 0, %s316
    %s318 = sphi 0, %s316
    %s319 = sphi 0, %s318
    %s333 = sphi 0, %s319
    %s339 = sphi 0, %s341
    %s342 = sphi 0, %s339
    %s343 = sphi 0, %s342
    %s359 = sphi 0, %s343
  $region4: #{up_block_forward.1} parent=0 // loop_header_branch
    %23 = sbr.rel (%p21) target = $region8
  $region5: #{up_block_forward.1} parent=0 // loop_body
    %s25 = ssub.s32 %s20, 1
    %s26 = ssub.s32 %s20, 2
    %s27 = sadd.s32 %s20, 1
    %s28 = ssub.s32 %s20, %s27
    %p29 = scmp.eq.s32.totalorder %s28, 0
    %s31 = sadd.s32 %s30, 1
    %s32 = scalar_select %p29, %s30, %s31
    %p35 = pneg %p29
    %p36 = scmp.eq.s32.totalorder %s20, 1
    %p37 = por %p35, %p36
    %p38 = scmp.ne.s32.totalorder %s30, %s33
    %p39 = scmp.eq.s32.totalorder %s20, 0
    %p40 = por %p38, %p39
    %p41 = scmp.ne.s32.totalorder %s30, %s33
    %p42 = scmp.eq.s32.totalorder %s25, 1
    %p43 = por %p41, %p42
    %p44 = scmp.ne.s32.totalorder %s33, %s34
    %p45 = scmp.eq.s32.totalorder %s25, 0
    %p46 = por %p44, %p45
    %p47 = scmp.ne.s32.totalorder %s33, %s34
    %p48 = scmp.eq.s32.totalorder %s26, 1
    %p49 = por %p47, %p48
    %p51 = scmp.ne.s32.totalorder %s34, %s50
    %p52 = scmp.eq.s32.totalorder %s26, 0
    %p53 = por %p51, %p52
    %s54 = ssub.s32 %s20, %s27
    %p55 = scmp.eq.s32.totalorder %s54, 0
    %s57 = sadd.s32 %s56, 1
    %s58 = scalar_select %p55, %s56, %s57
    %p61 = pneg %p55
    %p62 = scmp.eq.s32.totalorder %s20, 1
    %p63 = por %p61, %p62
    %p64 = scmp.ne.s32.totalorder %s56, %s59
    %p65 = scmp.eq.s32.totalorder %s20, 0
    %p66 = por %p64, %p65
    %p67 = scmp.ne.s32.totalorder %s56, %s59
    %p68 = scmp.eq.s32.totalorder %s25, 1
    %p69 = por %p67, %p68
    %p70 = scmp.ne.s32.totalorder %s59, %s60
    %p71 = scmp.eq.s32.totalorder %s25, 0
    %p72 = por %p70, %p71
    %p73 = scmp.ne.s32.totalorder %s59, %s60
    %p74 = scmp.eq.s32.totalorder %s26, 1
    %p75 = por %p73, %p74
    %p77 = scmp.ne.s32.totalorder %s60, %s76
    %p78 = scmp.eq.s32.totalorder %s26, 0
    %p79 = por %p77, %p78
    %s80 = ssub.s32 %s20, %s27
    %p81 = scmp.eq.s32.totalorder %s80, 0
    %s83 = sadd.s32 %s82, 1
    %s84 = scalar_select %p81, %s82, %s83
    %p87 = pneg %p81
    %p88 = scmp.eq.s32.totalorder %s20, 1
    %p89 = por %p87, %p88
    %p90 = scmp.ne.s32.totalorder %s82, %s85
    %p91 = scmp.eq.s32.totalorder %s20, 0
    %p92 = por %p90, %p91
    %p93 = scmp.ne.s32.totalorder %s82, %s85
    %p94 = scmp.eq.s32.totalorder %s25, 1
    %p95 = por %p93, %p94
    %p96 = scmp.ne.s32.totalorder %s85, %s86
    %p97 = scmp.eq.s32.totalorder %s25, 0
    %p98 = por %p96, %p97
    %p99 = scmp.ne.s32.totalorder %s85, %s86
    %p100 = scmp.eq.s32.totalorder %s26, 1
    %p101 = por %p99, %p100
    %p103 = scmp.ne.s32.totalorder %s86, %s102
    %p104 = scmp.eq.s32.totalorder %s26, 0
    %p105 = por %p103, %p104
    %s107 = sadd.s32 %s106, 1
    %p110 = scmp.eq.s32.totalorder %s20, 1
    %p111 = scmp.ne.s32.totalorder %s106, %s108
    %p112 = scmp.eq.s32.totalorder %s20, 0
    %p113 = por %p111, %p112
    %p114 = scmp.ne.s32.totalorder %s106, %s108
    %p115 = scmp.eq.s32.totalorder %s25, 1
    %p116 = por %p114, %p115
    %p117 = scmp.ne.s32.totalorder %s108, %s109
    %p118 = scmp.eq.s32.totalorder %s25, 0
    %p119 = por %p117, %p118
    %p120 = scmp.ne.s32.totalorder %s108, %s109
    %p121 = scmp.eq.s32.totalorder %s26, 1
    %p122 = por %p120, %p121
    %p124 = scmp.ne.s32.totalorder %s109, %s123
    %p125 = scmp.eq.s32.totalorder %s26, 0
    %p126 = por %p124, %p125
    %s128 = sadd.s32 %s127, 1
    %p131 = scmp.eq.s32.totalorder %s20, 1
    %p132 = scmp.ne.s32.totalorder %s127, %s129
    %p133 = scmp.eq.s32.totalorder %s20, 0
    %p134 = por %p132, %p133
    %p135 = scmp.ne.s32.totalorder %s127, %s129
    %p136 = scmp.eq.s32.totalorder %s25, 1
    %p137 = por %p135, %p136
    %p138 = scmp.ne.s32.totalorder %s129, %s130
    %p139 = scmp.eq.s32.totalorder %s25, 0
    %p140 = por %p138, %p139
    %p141 = scmp.ne.s32.totalorder %s129, %s130
    %p142 = scmp.eq.s32.totalorder %s26, 1
    %p143 = por %p141, %p142
    %p145 = scmp.ne.s32.totalorder %s130, %s144
    %p146 = scmp.eq.s32.totalorder %s26, 0
    %p147 = por %p145, %p146
    %s149 = sadd.s32 %s148, 1
    %p152 = scmp.eq.s32.totalorder %s20, 1
    %p153 = scmp.ne.s32.totalorder %s148, %s150
    %p154 = scmp.eq.s32.totalorder %s20, 0
    %p155 = por %p153, %p154
    %p156 = scmp.ne.s32.totalorder %s148, %s150
    %p157 = scmp.eq.s32.totalorder %s25, 1
    %p158 = por %p156, %p157
    %p159 = scmp.ne.s32.totalorder %s150, %s151
    %p160 = scmp.eq.s32.totalorder %s25, 0
    %p161 = por %p159, %p160
    %p162 = scmp.ne.s32.totalorder %s150, %s151
    %p163 = scmp.eq.s32.totalorder %s26, 1
    %p164 = por %p162, %p163
    %p166 = scmp.ne.s32.totalorder %s151, %s165
    %p167 = scmp.eq.s32.totalorder %s26, 0
    %p168 = por %p166, %p167
    %s170 = sadd.s32 %s169, 1
    %p173 = scmp.eq.s32.totalorder %s20, 1
    %p174 = scmp.ne.s32.totalorder %s169, %s171
    %p175 = scmp.eq.s32.totalorder %s20, 0
    %p176 = por %p174, %p175
    %p177 = scmp.ne.s32.totalorder %s169, %s171
    %p178 = scmp.eq.s32.totalorder %s25, 1
    %p179 = por %p177, %p178
    %p180 = scmp.ne.s32.totalorder %s171, %s172
    %p181 = scmp.eq.s32.totalorder %s25, 0
    %p182 = por %p180, %p181
    %p183 = scmp.ne.s32.totalorder %s171, %s172
    %p184 = scmp.eq.s32.totalorder %s26, 1
    %p185 = por %p183, %p184
    %p187 = scmp.ne.s32.totalorder %s172, %s186
    %p188 = scmp.eq.s32.totalorder %s26, 0
    %p189 = por %p187, %p188
    %s191 = sadd.s32 %s190, 1
    %p194 = scmp.eq.s32.totalorder %s20, 1
    %p195 = scmp.ne.s32.totalorder %s190, %s192
    %p196 = scmp.eq.s32.totalorder %s20, 0
    %p197 = por %p195, %p196
    %p198 = scmp.ne.s32.totalorder %s190, %s192
    %p199 = scmp.eq.s32.totalorder %s25, 1
    %p200 = por %p198, %p199
    %p201 = scmp.ne.s32.totalorder %s192, %s193
    %p202 = scmp.eq.s32.totalorder %s25, 0
    %p203 = por %p201, %p202
    %p204 = scmp.ne.s32.totalorder %s192, %s193
    %p205 = scmp.eq.s32.totalorder %s26, 1
    %p206 = por %p204, %p205
    %p208 = scmp.ne.s32.totalorder %s193, %s207
    %p209 = scmp.eq.s32.totalorder %s26, 0
    %p210 = por %p208, %p209
    %s212 = sadd.s32 %s211, 1
    %p215 = scmp.eq.s32.totalorder %s20, 1
    %p216 = scmp.ne.s32.totalorder %s211, %s213
    %p217 = scmp.eq.s32.totalorder %s20, 0
    %p218 = por %p216, %p217
    %p219 = scmp.ne.s32.totalorder %s211, %s213
    %p220 = scmp.eq.s32.totalorder %s25, 1
    %p221 = por %p219, %p220
    %p222 = scmp.ne.s32.totalorder %s213, %s214
    %p223 = scmp.eq.s32.totalorder %s25, 0
    %p224 = por %p222, %p223
    %p225 = scmp.ne.s32.totalorder %s213, %s214
    %p226 = scmp.eq.s32.totalorder %s26, 1
    %p227 = por %p225, %p226
    %p229 = scmp.ne.s32.totalorder %s214, %s228
    %p230 = scmp.eq.s32.totalorder %s26, 0
    %p231 = por %p229, %p230
    %s233 = sadd.s32 %s232, 1
    %p236 = scmp.eq.s32.totalorder %s20, 1
    %p237 = scmp.ne.s32.totalorder %s232, %s234
    %p238 = scmp.eq.s32.totalorder %s20, 0
    %p239 = por %p237, %p238
    %p240 = scmp.ne.s32.totalorder %s232, %s234
    %p241 = scmp.eq.s32.totalorder %s25, 1
    %p242 = por %p240, %p241
    %p243 = scmp.ne.s32.totalorder %s234, %s235
    %p244 = scmp.eq.s32.totalorder %s25, 0
    %p245 = por %p243, %p244
    %p246 = scmp.ne.s32.totalorder %s234, %s235
    %p247 = scmp.eq.s32.totalorder %s26, 1
    %p248 = por %p246, %p247
    %p250 = scmp.ne.s32.totalorder %s235, %s249
    %p251 = scmp.eq.s32.totalorder %s26, 0
    %p252 = por %p250, %p251
    %s254 = sadd.s32 %s253, 1
    %p257 = scmp.eq.s32.totalorder %s20, 1
    %p258 = scmp.ne.s32.totalorder %s253, %s255
    %p259 = scmp.eq.s32.totalorder %s20, 0
    %p260 = por %p258, %p259
    %p261 = scmp.ne.s32.totalorder %s253, %s255
    %p262 = scmp.eq.s32.totalorder %s25, 1
    %p263 = por %p261, %p262
    %p264 = scmp.ne.s32.totalorder %s255, %s256
    %p265 = scmp.eq.s32.totalorder %s25, 0
    %p266 = por %p264, %p265
    %p267 = scmp.ne.s32.totalorder %s255, %s256
    %p268 = scmp.eq.s32.totalorder %s26, 1
    %p269 = por %p267, %p268
    %p271 = scmp.ne.s32.totalorder %s256, %s270
    %p272 = scmp.eq.s32.totalorder %s26, 0
    %p273 = por %p271, %p272
    %s275 = sadd.s32 %s274, 1
    %p278 = scmp.eq.s32.totalorder %s20, 1
    %p279 = scmp.ne.s32.totalorder %s274, %s276
    %p280 = scmp.eq.s32.totalorder %s20, 0
    %p281 = por %p279, %p280
    %p282 = scmp.ne.s32.totalorder %s274, %s276
    %p283 = scmp.eq.s32.totalorder %s25, 1
    %p284 = por %p282, %p283
    %p285 = scmp.ne.s32.totalorder %s276, %s277
    %p286 = scmp.eq.s32.totalorder %s25, 0
    %p287 = por %p285, %p286
    %p288 = scmp.ne.s32.totalorder %s276, %s277
    %p289 = scmp.eq.s32.totalorder %s26, 1
    %p290 = por %p288, %p289
    %p292 = scmp.ne.s32.totalorder %s277, %s291
    %p293 = scmp.eq.s32.totalorder %s26, 0
    %p294 = por %p292, %p293
    %s296 = sadd.s32 %s295, 1
    %p299 = scmp.eq.s32.totalorder %s20, 1
    %p300 = scmp.ne.s32.totalorder %s295, %s297
    %p301 = scmp.eq.s32.totalorder %s20, 0
    %p302 = por %p300, %p301
    %p303 = scmp.ne.s32.totalorder %s295, %s297
    %p304 = scmp.eq.s32.totalorder %s25, 1
    %p305 = por %p303, %p304
    %p306 = scmp.ne.s32.totalorder %s297, %s298
    %p307 = scmp.eq.s32.totalorder %s25, 0
    %p308 = por %p306, %p307
    %p309 = scmp.ne.s32.totalorder %s297, %s298
    %p310 = scmp.eq.s32.totalorder %s26, 1
    %p311 = por %p309, %p310
    %p313 = scmp.ne.s32.totalorder %s298, %s312
    %p314 = scmp.eq.s32.totalorder %s26, 0
    %p315 = por %p313, %p314
    %s317 = sadd.s32 %s316, 1
    %p320 = scmp.eq.s32.totalorder %s20, 1
    %p321 = scmp.ne.s32.totalorder %s316, %s318
    %p322 = scmp.eq.s32.totalorder %s20, 0
    %p323 = por %p321, %p322
    %p324 = scmp.ne.s32.totalorder %s316, %s318
    %p325 = scmp.eq.s32.totalorder %s25, 1
    %p326 = por %p324, %p325
    %p327 = scmp.ne.s32.totalorder %s318, %s319
    %p328 = scmp.eq.s32.totalorder %s25, 0
    %p329 = por %p327, %p328
    %p330 = scmp.ne.s32.totalorder %s318, %s319
    %p331 = scmp.eq.s32.totalorder %s26, 1
    %p332 = por %p330, %p331
    %p334 = scmp.ne.s32.totalorder %s319, %s333
    %p335 = scmp.eq.s32.totalorder %s26, 0
    %p336 = por %p334, %p335
    %s337 = ssub.s32 %s20, %s27
    %p338 = scmp.eq.s32.totalorder %s337, 0
    %s340 = sadd.s32 %s339, 1
    %s341 = scalar_select %p338, %s339, %s340
    %p344 = pneg %p338
    %p345 = scmp.eq.s32.totalorder %s20, 1
    %p346 = por %p344, %p345
    %p347 = scmp.ne.s32.totalorder %s339, %s342
    %p348 = scmp.eq.s32.totalorder %s20, 0
    %p349 = por %p347, %p348
    %p350 = scmp.ne.s32.totalorder %s339, %s342
    %p351 = scmp.eq.s32.totalorder %s25, 1
    %p352 = por %p350, %p351
    %p353 = scmp.ne.s32.totalorder %s342, %s343
    %p354 = scmp.eq.s32.totalorder %s25, 0
    %p355 = por %p353, %p354
    %p356 = scmp.ne.s32.totalorder %s342, %s343
    %p357 = scmp.eq.s32.totalorder %s26, 1
    %p358 = por %p356, %p357
    %p360 = scmp.ne.s32.totalorder %s343, %s359
    %p361 = scmp.eq.s32.totalorder %s26, 0
    %p362 = por %p360, %p361
    %p363 = scmp.le.s32.totalorder 1, %s20
    %p364 = scmp.lt.s32.totalorder %s20, 3
    %p365 = pnand %p363, %p364
    %p366 = pneg %p365
    // Predicated region
    $region9: #{up_block_forward.1} parent=5 // pred_check
      _
    $region10: #{up_block_forward.1} parent=5 // pred_check_branch
      %368 = sbr.rel (%p365) target = $region12
    $region11: #{up_block_forward.1} parent=5 // pred_region
      %s369 = ssub.s32 %s20, 1
      // Predicated region
      $region13: #{up_block_forward.1} parent=11 // pred_check
        %p370 = pneg %p119
      $region14: #{up_block_forward.1} parent=11 // pred_check_branch
        %372 = sbr.rel (%p370) target = $region16
      $region15: #{up_block_forward.1} parent=11 // pred_region
        _
      $region16: #{up_block_forward.1} parent=11 // pred_fallthru
        _
      // Predicated region
      $region17: #{up_block_forward.1} parent=11 // pred_check
        %p373 = pneg %p140
      $region18: #{up_block_forward.1} parent=11 // pred_check_branch
        %375 = sbr.rel (%p373) target = $region20
      $region19: #{up_block_forward.1} parent=11 // pred_region
        _
      $region20: #{up_block_forward.1} parent=11 // pred_fallthru
        _
      // Predicated region
      $region21: #{up_block_forward.1} parent=11 // pred_check
        %p376 = pneg %p161
      $region22: #{up_block_forward.1} parent=11 // pred_check_branch
        %378 = sbr.rel (%p376) target = $region24
      $region23: #{up_block_forward.1} parent=11 // pred_region
        _
      $region24: #{up_block_forward.1} parent=11 // pred_fallthru
        _
      // Predicated region
      $region25: #{up_block_forward.1} parent=11 // pred_check
        %p379 = pneg %p182
      $region26: #{up_block_forward.1} parent=11 // pred_check_branch
        %381 = sbr.rel (%p379) target = $region28
      $region27: #{up_block_forward.1} parent=11 // pred_region
        _
      $region28: #{up_block_forward.1} parent=11 // pred_fallthru
        _
      // Predicated region
      $region29: #{up_block_forward.1} parent=11 // pred_check
        %p382 = pneg %p203
      $region30: #{up_block_forward.1} parent=11 // pred_check_branch
        %384 = sbr.rel (%p382) target = $region32
      $region31: #{up_block_forward.1} parent=11 // pred_region
        _
      $region32: #{up_block_forward.1} parent=11 // pred_fallthru
        _
      // Predicated region
      $region33: #{up_block_forward.1} parent=11 // pred_check
        %p385 = pneg %p224
      $region34: #{up_block_forward.1} parent=11 // pred_check_branch
        %387 = sbr.rel (%p385) target = $region36
      $region35: #{up_block_forward.1} parent=11 // pred_region
        _
      $region36: #{up_block_forward.1} parent=11 // pred_fallthru
        _
      // Predicated region
      $region37: #{up_block_forward.1} parent=11 // pred_check
        %p388 = pneg %p245
      $region38: #{up_block_forward.1} parent=11 // pred_check_branch
        %390 = sbr.rel (%p388) target = $region40
      $region39: #{up_block_forward.1} parent=11 // pred_region
        _
      $region40: #{up_block_forward.1} parent=11 // pred_fallthru
        _
      // Predicated region
      $region41: #{up_block_forward.1} parent=11 // pred_check
        %p391 = pneg %p266
      $region42: #{up_block_forward.1} parent=11 // pred_check_branch
        %393 = sbr.rel (%p391) target = $region44
      $region43: #{up_block_forward.1} parent=11 // pred_region
        _
      $region44: #{up_block_forward.1} parent=11 // pred_fallthru
        _
      // Predicated region
      $region45: #{up_block_forward.1} parent=11 // pred_check
        %p394 = pneg %p287
      $region46: #{up_block_forward.1} parent=11 // pred_check_branch
        %396 = sbr.rel (%p394) target = $region48
      $region47: #{up_block_forward.1} parent=11 // pred_region
        _
      $region48: #{up_block_forward.1} parent=11 // pred_fallthru
        _
      // Predicated region
      $region49: #{up_block_forward.1} parent=11 // pred_check
        %p397 = pneg %p308
      $region50: #{up_block_forward.1} parent=11 // pred_check_branch
        %399 = sbr.rel (%p397) target = $region52
      $region51: #{up_block_forward.1} parent=11 // pred_region
        _
      $region52: #{up_block_forward.1} parent=11 // pred_fallthru
        _
      // Predicated region
      $region53: #{up_block_forward.1} parent=11 // pred_check
        %p400 = pneg %p329
      $region54: #{up_block_forward.1} parent=11 // pred_check_branch
        %402 = sbr.rel (%p400) target = $region56
      $region55: #{up_block_forward.1} parent=11 // pred_region
        _
      $region56: #{up_block_forward.1} parent=11 // pred_fallthru
        _
    $region12: #{up_block_forward.1} parent=5 // pred_fallthru
      _
    %p403 = scmp.lt.s32.totalorder %s20, 2
    // Predicated region
    $region57: #{up_block_forward.1} parent=5 // pred_check
      %p404 = pneg %p403
    $region58: #{up_block_forward.1} parent=5 // pred_check_branch
      %406 = sbr.rel (%p404) target = $region60
    $region59: #{up_block_forward.1} parent=5 // pred_region
      // Predicated region
      $region61: #{up_block_forward.1} parent=59 // pred_check
        %p407 = pneg %p40
      $region62: #{up_block_forward.1} parent=59 // pred_check_branch
        %409 = sbr.rel (%p407) target = $region64
      $region63: #{up_block_forward.1} parent=59 // pred_region
        %p410 = scmp.lt.s32.totalorder %s20, 1
        %s411 = scalar_select %p410, %s20, 1
        %s412 = smul.addr %s411, 2
        %s413 = smul.addr %s412, 2
        %s414 = scalar_lea.vmem %s0, %s413
      $region64: #{up_block_forward.1} parent=59 // pred_fallthru
        _
      // Predicated region
      $region65: #{up_block_forward.1} parent=59 // pred_check
        %p415 = pneg %p66
      $region66: #{up_block_forward.1} parent=59 // pred_check_branch
        %417 = sbr.rel (%p415) target = $region68
      $region67: #{up_block_forward.1} parent=59 // pred_region
        %p418 = scmp.lt.s32.totalorder %s20, 1
        %s419 = scalar_select %p418, %s20, 1
        %s420 = smul.addr %s419, 2
        %s421 = scalar_lea.vmem %s1, %s420
      $region68: #{up_block_forward.1} parent=59 // pred_fallthru
        _
      // Predicated region
      $region69: #{up_block_forward.1} parent=59 // pred_check
        %p422 = pneg %p92
      $region70: #{up_block_forward.1} parent=59 // pred_check_branch
        %424 = sbr.rel (%p422) target = $region72
      $region71: #{up_block_forward.1} parent=59 // pred_region
        %p425 = scmp.lt.s32.totalorder %s20, 1
        %s426 = scalar_select %p425, %s20, 1
        %s427 = scalar_lea.vmem %s2, %s426
      $region72: #{up_block_forward.1} parent=59 // pred_fallthru
        _
    $region60: #{up_block_forward.1} parent=5 // pred_fallthru
      _
    %p428 = scmp.le.s32.totalorder 1, %s20
    %p429 = scmp.lt.s32.totalorder %s20, 3
    %p430 = pnand %p428, %p429
    %p431 = pneg %p430
    // Predicated region
    $region73: #{up_block_forward.1} parent=5 // pred_check
      _
    $region74: #{up_block_forward.1} parent=5 // pred_check_branch
      %433 = sbr.rel (%p430) target = $region76
    $region75: #{up_block_forward.1} parent=5 // pred_region
      %s434 = ssub.s32 %s20, 1
      %p435 = scmp.lt.s32.totalorder %s25, 1
      %s436 = scalar_select %p435, %s25, 1
      %s437 = smul.addr %s436, 2
      %s438 = smul.addr %s437, 2
      %s439 = scalar_lea.vmem %s0, %s438
      %p440 = pneg %p46
      %p441 = pneg %p43
      %p442 = scmp.lt.s32.totalorder %s25, 1
      %s443 = scalar_select %p442, %s25, 1
      %s444 = smul.addr %s443, 2
      %s445 = scalar_lea.vmem %s1, %s444
      %p446 = pneg %p72
      %p447 = pneg %p69
      %p448 = scmp.lt.s32.totalorder %s25, 1
      %s449 = scalar_select %p448, %s25, 1
      %s450 = scalar_lea.vmem %s2, %s449
      %p451 = pneg %p98
      %p452 = pneg %p95
      %p453 = pneg %p119
      %p454 = pneg %p116
      %p455 = pneg %p140
      %p456 = pneg %p137
      %p457 = pneg %p161
      %p458 = pneg %p158
      %p459 = pneg %p182
      %p460 = pneg %p179
      %p461 = pneg %p203
      %p462 = pneg %p200
      %p463 = pneg %p224
      %p464 = pneg %p221
      %p465 = pneg %p245
      %p466 = pneg %p242
      %p467 = pneg %p266
      %p468 = pneg %p263
      %p469 = pneg %p287
      %p470 = pneg %p284
      %p471 = pneg %p308
      %p472 = pneg %p305
      %p473 = pneg %p329
      %p474 = pneg %p326
      %p475 = pneg %p355
      %p476 = pneg %p352
      %p477 = scmp.lt.s32.totalorder %s25, 1
      %s478 = scalar_select %p477, %s25, 1
      %s479 = smul.addr %s478, 2
      %s480 = smul.addr %s479, 8
      %s481 = scalar_lea.vmem %s14, %s480
      %p482 = scmp.lt.s32.totalorder %s25, 1
      %s483 = scalar_select %p482, %s25, 1
      %s484 = smul.addr %s483, 2
      %s485 = smul.addr %s484, 2
      %s486 = scalar_lea.vmem %s0, %s485
      %p487 = scmp.lt.s32.totalorder %s25, 1
      %s488 = scalar_select %p487, %s25, 1
      %s489 = smul.addr %s488, 2
      %s490 = scalar_lea.vmem %s1, %s489
      %p491 = scmp.lt.s32.totalorder %s25, 1
      %s492 = scalar_select %p491, %s25, 1
      %s493 = scalar_lea.vmem %s2, %s492
      %p494 = scmp.lt.s32.totalorder %s25, 1
      %s495 = scalar_select %p494, %s25, 1
      %s496 = smul.addr %s495, 2
      %s497 = smul.addr %s496, 8
      %s498 = scalar_lea.vmem %s14, %s497
      %500 = vst [vmem:[#allocation2] sm:$0xf] 0
      %501 = vst [vmem:[#allocation2 + $0xc] sm:$0xf] 0
      %v502 = vlaneseq
      %v503 = vand.u32 %v502, 127
      %v504 = vadd.s32 %v503, 128
      %v505 = vand.u32 %v503, 15
      %v506 = vand.u32 %v504, 15
      %vm507 = vcmp.gt.s32.totalorder %v505, 0
      %vm508 = vcmp.gt.s32.totalorder %v506, 0
      %v509 = vsel %vm507, 1, 0
      %v510 = vsel %vm508, 1, 0
      %v511 = vcvt.s32.f32 %v509
      %v512 = vcvt.s32.f32 %v510
      %v513 = vpack.c.bf16 %v511, %v511
      %v514 = vpack.c.bf16 %v512, %v512
      %vm515 = vcmp.lt.s32.totalorder %v505, 15
      %vm516 = vcmp.lt.s32.totalorder %v506, 15
      %v517 = vsel %vm515, 1, 0
      %v518 = vsel %vm516, 1, 0
      %v519 = vcvt.s32.f32 %v517
      %v520 = vcvt.s32.f32 %v518
      %v521 = vpack.c.bf16 %v519, %v519
      %v522 = vpack.c.bf16 %v520, %v520
      %v523 = vld [vmem:[%s486] sm:$0xf]
      %v524 = vld [vmem:[%s490] sm:$0x3]
      %v525 = vld [vmem:[%s493] sm:$0x1]
      %v526 = vld [vmem:[%s3] sm:$0xf]
      %v527 = vld [vmem:[%s4] sm:$0xff]
      %529 = vset.pattern.permute.xlu0 0
      %530 = vperm.xlu0 %529, %v527
      %v531 = vpop.permute.xlu0 %530
      %v535 = vunpack.c.l.s4 1983009808
      %v536 = vunpack.c.0.s8 %v535
      %v537 = vlaneseq
      %v538 = vshrl.u32 %v537, 7
      %v539 = vsub.s32 %v536, %v538
      %v540 = vrot.slane %v523, %v539
      %v541 = vcombine.high %v540, %v540
      %vm542 = vcmask 31744
      %v544 = vsel %vm542, %v526, 0
      %vm546 = vcmask 1041408
      %v548 = vsel %vm546, %v540, 0
      %v551 = vsel %vm546, %v541, 0
      %553 = vmatprep.subr.bf16.mxu0 0
      %554 = vmatpush1.bf16.msra.mxu0 0
      %555 = vmatprep.subr.bf16.mxu0 0
      %556 = vmatpush1.bf16.msra.mxu0 0
      %557 = vmatprep.subr.bf16.mxu0 0
      %558 = vmatpush1.bf16.msra.mxu0 0
      %559 = vmatprep.subr.bf16.mxu0 0
      %560 = vmatpush1.bf16.msra.mxu0 0
      %561 = vmatprep.subr.bf16.mxu0 0
      %562 = vmatpush1.bf16.msra.mxu0 0
      %563 = vmatprep.subr.bf16.mxu0 0
      %564 = vmatpush1.bf16.msra.mxu0 0
      %565 = vmatprep.subr.bf16.mxu0 0
      %566 = vmatpush1.bf16.msra.mxu0 0
      %567 = vmatprep.subr.bf16.mxu0 %v551
      %568 = vmatpush1.bf16.msra.mxu0 %v548
      %569 = vmatprep.subr.bf16.mxu0 0
      %570 = vmatpush2.bf16.msra.mxu0 0
      %571 = vmatprep.subr.bf16.mxu0 0
      %572 = vmatpush2.bf16.msra.mxu0 0
      %573 = vmatprep.subr.bf16.mxu0 0
      %574 = vmatpush2.bf16.msra.mxu0 0
      %575 = vmatprep.subr.bf16.mxu0 0
      %576 = vmatpush2.bf16.msra.mxu0 0
      %577 = vmatprep.subr.bf16.mxu0 0
      %578 = vmatpush2.bf16.msra.mxu0 0
      %579 = vmatprep.subr.bf16.mxu0 0
      %580 = vmatpush2.bf16.msra.mxu0 0
      %581 = vmatprep.subr.bf16.mxu0 0
      %582 = vmatpush2.bf16.msra.mxu0 0
      %583 = vmatprep.subr.bf16.mxu0 0
      %584 = vmatpush2.bf16.msra.mxu0 0
      %585 = vmatprep.mubr.bf16.mxu0 0
      %586 = vmatmul.mubr.bf16.gmra.mxu0 %v544
      %v587 = vpop.f32.mrf.mxu0
      %v588 = vadd.f32 %v531, %v587
      %v589 = vpop.f32.mrf.mxu0
      %v590 = vadd.f32 %v531, %v589
      %v591 = vpop.f32.mrf.mxu0
      %v592 = vpop.f32.mrf.mxu0
      %593 = vdwg.mxu0
      %v594 = vld [vmem:[%s5] sm:$0xf]
      %v595 = vld [vmem:[%s6] sm:$0xf]
      %v598 = vunpack.c.l.s4 1966171168
      %v599 = vunpack.c.0.s8 %v598
      %v600 = vlaneseq
      %v601 = vshrl.u32 %v600, 7
      %v602 = vsub.s32 %v599, %v601
      %v603 = vrot.slane %v524, %v602
      %v604 = vcombine.high %v603, %v603
      %v606 = vunpack.c.l.s4 1966171168
      %v607 = vunpack.c.0.s8 %v606
      %v608 = vlaneseq
      %v609 = vshrl.u32 %v608, 7
      %v610 = vsub.s32 %v607, %v609
      %v611 = vrot.slane %v603, %v610
      %v613 = vunpack.c.l.s4 1966171168
      %v614 = vunpack.c.0.s8 %v613
      %v615 = vlaneseq
      %v616 = vshrl.u32 %v615, 7
      %v617 = vsub.s32 %v614, %v616
      %v618 = vrot.slane %v604, %v617
      %vm619 = vcmask 7168
      %v621 = vsel %vm619, %v595, 0
      %vm623 = vcmask 1040384
      %v624 = vsel 0, 4294967295, 65535
      %v625 = vsel %vm623, %v624, 0
      %v627 = vand.u32 %v611, %v625
      %v630 = vand.u32 %v618, %v625
      %632 = vmatprep.subr.bf16.mxu0 0
      %633 = vmatpush1.bf16.msra.mxu0 0
      %634 = vmatprep.subr.bf16.mxu0 0
      %635 = vmatpush1.bf16.msra.mxu0 0
      %636 = vmatprep.subr.bf16.mxu0 0
      %637 = vmatpush1.bf16.msra.mxu0 0
      %638 = vmatprep.subr.bf16.mxu0 0
      %639 = vmatpush1.bf16.msra.mxu0 0
      %640 = vmatprep.subr.bf16.mxu0 0
      %641 = vmatpush1.bf16.msra.mxu0 0
      %642 = vmatprep.subr.bf16.mxu0 0
      %643 = vmatpush1.bf16.msra.mxu0 0
      %644 = vmatprep.subr.bf16.mxu0 0
      %645 = vmatpush1.bf16.msra.mxu0 0
      %646 = vmatprep.subr.bf16.mxu0 %v630
      %647 = vmatpush1.bf16.msra.mxu0 %v627
      %648 = vmatprep.subr.bf16.mxu0 0
      %649 = vmatpush2.bf16.msra.mxu0 0
      %650 = vmatprep.subr.bf16.mxu0 0
      %651 = vmatpush2.bf16.msra.mxu0 0
      %652 = vmatprep.subr.bf16.mxu0 0
      %653 = vmatpush2.bf16.msra.mxu0 0
      %654 = vmatprep.subr.bf16.mxu0 0
      %655 = vmatpush2.bf16.msra.mxu0 0
      %656 = vmatprep.subr.bf16.mxu0 0
      %657 = vmatpush2.bf16.msra.mxu0 0
      %658 = vmatprep.subr.bf16.mxu0 0
      %659 = vmatpush2.bf16.msra.mxu0 0
      %660 = vmatprep.subr.bf16.mxu0 0
      %661 = vmatpush2.bf16.msra.mxu0 0
      %662 = vmatprep.subr.bf16.mxu0 0
      %663 = vmatpush2.bf16.msra.mxu0 0
      %664 = vmatprep.mubr.bf16.mxu0 0
      %665 = vmatmul.mubr.bf16.gmra.mxu0 %v621
      %v666 = vpop.f32.mrf.mxu0
      %v667 = vadd.f32 0.0, %v666
      %v668 = vpop.f32.mrf.mxu0
      %v669 = vadd.f32 0.0, %v668
      %v670 = vpop.f32.mrf.mxu0
      %v671 = vpop.f32.mrf.mxu0
      %672 = vdwg.mxu0
      %v674 = vsel %vm542, %v594, 0
      %676 = vmatprep.subr.bf16.mxu0 0
      %677 = vmatpush1.bf16.msra.mxu0 0
      %678 = vmatprep.subr.bf16.mxu0 0
      %679 = vmatpush1.bf16.msra.mxu0 0
      %680 = vmatprep.subr.bf16.mxu0 0
      %681 = vmatpush1.bf16.msra.mxu0 0
      %682 = vmatprep.subr.bf16.mxu0 0
      %683 = vmatpush1.bf16.msra.mxu0 0
      %684 = vmatprep.subr.bf16.mxu0 0
      %685 = vmatpush1.bf16.msra.mxu0 0
      %686 = vmatprep.subr.bf16.mxu0 0
      %687 = vmatpush1.bf16.msra.mxu0 0
      %688 = vmatprep.subr.bf16.mxu0 0
      %689 = vmatpush1.bf16.msra.mxu0 0
      %690 = vmatprep.subr.bf16.mxu0 %v551
      %691 = vmatpush1.bf16.msra.mxu0 %v548
      %692 = vmatprep.subr.bf16.mxu0 0
      %693 = vmatpush2.bf16.msra.mxu0 0
      %694 = vmatprep.subr.bf16.mxu0 0
      %695 = vmatpush2.bf16.msra.mxu0 0
      %696 = vmatprep.subr.bf16.mxu0 0
      %697 = vmatpush2.bf16.msra.mxu0 0
      %698 = vmatprep.subr.bf16.mxu0 0
      %699 = vmatpush2.bf16.msra.mxu0 0
      %700 = vmatprep.subr.bf16.mxu0 0
      %701 = vmatpush2.bf16.msra.mxu0 0
      %702 = vmatprep.subr.bf16.mxu0 0
      %703 = vmatpush2.bf16.msra.mxu0 0
      %704 = vmatprep.subr.bf16.mxu0 0
      %705 = vmatpush2.bf16.msra.mxu0 0
      %706 = vmatprep.subr.bf16.mxu0 0
      %707 = vmatpush2.bf16.msra.mxu0 0
      %708 = vmatprep.mubr.bf16.mxu0 0
      %709 = vmatmul.mubr.bf16.gmra.mxu0 %v674
      %v710 = vpop.f32.mrf.mxu0
      %v711 = vadd.f32 %v667, %v710
      %v712 = vpop.f32.mrf.mxu0
      %v713 = vadd.f32 %v669, %v712
      %v714 = vpop.f32.mrf.mxu0
      %v715 = vpop.f32.mrf.mxu0
      %716 = vdwg.mxu0
      %v717 = vld [vmem:[%s7] sm:$0xff]
      %719 = vset.pattern.permute.xlu0 0
      %720 = vperm.xlu0 %719, %v717
      %v721 = vpop.permute.xlu0 %720
      %v723 = vadd.f32 %v711, %v721
      %v724 = vadd.f32 %v713, %v721
      %vm725 = vcmp.ge.f32.partialorder %v723, 0.0
      %vm726 = vcmp.ge.f32.partialorder %v724, 0.0
      %v727 = vmul.f32 %v723, 0.2
      %v728 = vmul.f32 %v724, 0.2
      %v729 = vsel %vm725, %v723, %v727
      %v730 = vsel %vm726, %v724, %v728
      %v731 = vpack.c.bf16 %v729, %v729
      %v732 = vpack.c.bf16 %v730, %v730
      %v735 = vunpack.c.l.b16 %v731
      %v736 = vunpack.c.l.b16 %v732
      %v737 = vpack.c.b16 %v736, %v735
      %739 = vst [vmem:[#allocation2 + $0x4] sm:$0xff] %v737
      %v740 = vld [vmem:[#allocation2] sm:$0xff]
      %v741 = vld [vmem:[#allocation2 + $0x8] sm:$0xf]
      %v744 = vunpack.c.l.b16 %v513
      %v745 = vunpack.c.l.b16 %v514
      %v746 = vpack.c.b16 %v745, %v744
      %747 = vrot.lane.b32.xlu0 %v746, 111
      %v748 = vpop.permute.xlu0 %747
      %v749 = vrot.slane %v748, 4
      %vm750 = vcmask 908288
      %v751 = vsel %vm750, %v749, %v748
      %v754 = vmul.bf16 %v740, %v751
      %v755 = vmul.bf16 %v741, %v749
      %v756 = vld [vmem:[%s8] sm:$0xf]
      %s757 = scalar_lea.vmem %s8, 4
      %v758 = vld [vmem:[%s757] sm:$0xf]
      %v761 = vunpack.c.l.b16 %v740
      %v762 = vunpack.c.h.b16 %v740
      %v763 = vunpack.c.l.b16 %v741
      %v764 = vpack.c.b16 %v761, %v761
      %v765 = vpack.c.b16 %v762, %v762
      %v766 = vpack.c.b16 %v763, %v763
      %767 = vrot.lane.b32.xlu0 %v764, 16
      %v768 = vpop.permute.xlu0 %767
      %769 = vrot.lane.b32.xlu0 %v765, 16
      %v770 = vpop.permute.xlu0 %769
      %771 = vrot.lane.b32.xlu0 %v766, 16
      %v772 = vpop.permute.xlu0 %771
      %vm773 = vcmask 130048
      %v774 = vsel %vm773, %v768, %v770
      %v775 = vsel %vm773, %v770, %v772
      %vm776 = vcmask 64512
      %v778 = vsel %vm776, %v758, 0
      %vm780 = vcmask 1043456
      %v782 = vsel %vm780, %v774, 0
      %v785 = vsel %vm780, %v775, 0
      %787 = vmatprep.subr.bf16.mxu0 0
      %788 = vmatpush1.bf16.msra.mxu0 0
      %789 = vmatprep.subr.bf16.mxu0 0
      %790 = vmatpush1.bf16.msra.mxu0 0
      %791 = vmatprep.subr.bf16.mxu0 0
      %792 = vmatpush1.bf16.msra.mxu0 0
      %793 = vmatprep.subr.bf16.mxu0 0
      %794 = vmatpush1.bf16.msra.mxu0 0
      %795 = vmatprep.subr.bf16.mxu0 0
      %796 = vmatpush1.bf16.msra.mxu0 0
      %797 = vmatprep.subr.bf16.mxu0 0
      %798 = vmatpush1.bf16.msra.mxu0 0
      %799 = vmatprep.subr.bf16.mxu0 0
      %800 = vmatpush1.bf16.msra.mxu0 0
      %801 = vmatprep.subr.bf16.mxu0 %v785
      %802 = vmatpush1.bf16.msra.mxu0 %v782
      %803 = vmatprep.subr.bf16.mxu0 0
      %804 = vmatpush2.bf16.msra.mxu0 0
      %805 = vmatprep.subr.bf16.mxu0 0
      %806 = vmatpush2.bf16.msra.mxu0 0
      %807 = vmatprep.subr.bf16.mxu0 0
      %808 = vmatpush2.bf16.msra.mxu0 0
      %809 = vmatprep.subr.bf16.mxu0 0
      %810 = vmatpush2.bf16.msra.mxu0 0
      %811 = vmatprep.subr.bf16.mxu0 0
      %812 = vmatpush2.bf16.msra.mxu0 0
      %813 = vmatprep.subr.bf16.mxu0 0
      %814 = vmatpush2.bf16.msra.mxu0 0
      %815 = vmatprep.subr.bf16.mxu0 0
      %816 = vmatpush2.bf16.msra.mxu0 0
      %817 = vmatprep.subr.bf16.mxu0 0
      %818 = vmatpush2.bf16.msra.mxu0 0
      %819 = vmatprep.mubr.bf16.mxu0 0
      %820 = vmatmul.mubr.bf16.gmra.mxu0 %v778
      %v821 = vpop.f32.mrf.mxu0
      %v822 = vadd.f32 0.0, %v821
      %v823 = vpop.f32.mrf.mxu0
      %v824 = vadd.f32 0.0, %v823
      %v825 = vpop.f32.mrf.mxu0
      %v826 = vpop.f32.mrf.mxu0
      %827 = vdwg.mxu0
      %v830 = vunpack.c.l.b16 %v754
      %v831 = vunpack.c.h.b16 %v754
      %v832 = vunpack.c.l.b16 %v755
      %v833 = vpack.c.b16 %v830, %v830
      %v834 = vpack.c.b16 %v831, %v831
      %v835 = vpack.c.b16 %v832, %v832
      %836 = vrot.lane.b32.xlu0 %v833, 17
      %v837 = vpop.permute.xlu0 %836
      %838 = vrot.lane.b32.xlu0 %v834, 17
      %v839 = vpop.permute.xlu0 %838
      %840 = vrot.lane.b32.xlu0 %v835, 17
      %v841 = vpop.permute.xlu0 %840
      %vm842 = vcmask 138240
      %v843 = vsel %vm842, %v837, %v839
      %v844 = vsel %vm842, %v839, %v841
      %v846 = vsel %vm776, %v756, 0
      %v849 = vsel %vm780, %v843, 0
      %v852 = vsel %vm780, %v844, 0
      %854 = vmatprep.subr.bf16.mxu0 0
      %855 = vmatpush1.bf16.msra.mxu0 0
      %856 = vmatprep.subr.bf16.mxu0 0
      %857 = vmatpush1.bf16.msra.mxu0 0
      %858 = vmatprep.subr.bf16.mxu0 0
      %859 = vmatpush1.bf16.msra.mxu0 0
      %860 = vmatprep.subr.bf16.mxu0 0
      %861 = vmatpush1.bf16.msra.mxu0 0
      %862 = vmatprep.subr.bf16.mxu0 0
      %863 = vmatpush1.bf16.msra.mxu0 0
      %864 = vmatprep.subr.bf16.mxu0 0
      %865 = vmatpush1.bf16.msra.mxu0 0
      %866 = vmatprep.subr.bf16.mxu0 0
      %867 = vmatpush1.bf16.msra.mxu0 0
      %868 = vmatprep.subr.bf16.mxu0 %v852
      %869 = vmatpush1.bf16.msra.mxu0 %v849
      %870 = vmatprep.subr.bf16.mxu0 0
      %871 = vmatpush2.bf16.msra.mxu0 0
      %872 = vmatprep.subr.bf16.mxu0 0
      %873 = vmatpush2.bf16.msra.mxu0 0
      %874 = vmatprep.subr.bf16.mxu0 0
      %875 = vmatpush2.bf16.msra.mxu0 0
      %876 = vmatprep.subr.bf16.mxu0 0
      %877 = vmatpush2.bf16.msra.mxu0 0
      %878 = vmatprep.subr.bf16.mxu0 0
      %879 = vmatpush2.bf16.msra.mxu0 0
      %880 = vmatprep.subr.bf16.mxu0 0
      %881 = vmatpush2.bf16.msra.mxu0 0
      %882 = vmatprep.subr.bf16.mxu0 0
      %883 = vmatpush2.bf16.msra.mxu0 0
      %884 = vmatprep.subr.bf16.mxu0 0
      %885 = vmatpush2.bf16.msra.mxu0 0
      %886 = vmatprep.mubr.bf16.mxu0 0
      %887 = vmatmul.mubr.bf16.gmra.mxu0 %v846
      %v888 = vpop.f32.mrf.mxu0
      %v889 = vadd.f32 %v822, %v888
      %v890 = vpop.f32.mrf.mxu0
      %v891 = vadd.f32 %v824, %v890
      %v892 = vpop.f32.mrf.mxu0
      %v893 = vpop.f32.mrf.mxu0
      %894 = vdwg.mxu0
      %v897 = vunpack.c.l.b16 %v521
      %v898 = vunpack.c.l.b16 %v522
      %v899 = vpack.c.b16 %v898, %v897
      %900 = vrot.lane.b32.xlu0 %v899, 113
      %v901 = vpop.permute.xlu0 %900
      %v902 = vrot.slane %v901, 4
      %vm903 = vcmask 924672
      %v904 = vsel %vm903, %v902, %v901
      %v907 = vmul.bf16 %v740, %v904
      %v908 = vmul.bf16 %v741, %v902
      %s909 = scalar_lea.vmem %s8, 8
      %v910 = vld [vmem:[%s909] sm:$0xf]
      %v913 = vunpack.c.l.b16 %v907
      %v914 = vunpack.c.h.b16 %v907
      %v915 = vunpack.c.l.b16 %v908
      %v916 = vpack.c.b16 %v913, %v913
      %v917 = vpack.c.b16 %v914, %v914
      %v918 = vpack.c.b16 %v915, %v915
      %919 = vrot.lane.b32.xlu0 %v916, 15
      %v920 = vpop.permute.xlu0 %919
      %921 = vrot.lane.b32.xlu0 %v917, 15
      %v922 = vpop.permute.xlu0 %921
      %923 = vrot.lane.b32.xlu0 %v918, 15
      %v924 = vpop.permute.xlu0 %923
      %vm925 = vcmask 121856
      %v926 = vsel %vm925, %v920, %v922
      %v927 = vsel %vm925, %v922, %v924
      %v929 = vsel %vm776, %v910, 0
      %v932 = vsel %vm780, %v926, 0
      %v935 = vsel %vm780, %v927, 0
      %937 = vmatprep.subr.bf16.mxu0 0
      %938 = vmatpush1.bf16.msra.mxu0 0
      %939 = vmatprep.subr.bf16.mxu0 0
      %940 = vmatpush1.bf16.msra.mxu0 0
      %941 = vmatprep.subr.bf16.mxu0 0
      %942 = vmatpush1.bf16.msra.mxu0 0
      %943 = vmatprep.subr.bf16.mxu0 0
      %944 = vmatpush1.bf16.msra.mxu0 0
      %945 = vmatprep.subr.bf16.mxu0 0
      %946 = vmatpush1.bf16.msra.mxu0 0
      %947 = vmatprep.subr.bf16.mxu0 0
      %948 = vmatpush1.bf16.msra.mxu0 0
      %949 = vmatprep.subr.bf16.mxu0 0
      %950 = vmatpush1.bf16.msra.mxu0 0
      %951 = vmatprep.subr.bf16.mxu0 %v935
      %952 = vmatpush1.bf16.msra.mxu0 %v932
      %953 = vmatprep.subr.bf16.mxu0 0
      %954 = vmatpush2.bf16.msra.mxu0 0
      %955 = vmatprep.subr.bf16.mxu0 0
      %956 = vmatpush2.bf16.msra.mxu0 0
      %957 = vmatprep.subr.bf16.mxu0 0
      %958 = vmatpush2.bf16.msra.mxu0 0
      %959 = vmatprep.subr.bf16.mxu0 0
      %960 = vmatpush2.bf16.msra.mxu0 0
      %961 = vmatprep.subr.bf16.mxu0 0
      %962 = vmatpush2.bf16.msra.mxu0 0
      %963 = vmatprep.subr.bf16.mxu0 0
      %964 = vmatpush2.bf16.msra.mxu0 0
      %965 = vmatprep.subr.bf16.mxu0 0
      %966 = vmatpush2.bf16.msra.mxu0 0
      %967 = vmatprep.subr.bf16.mxu0 0
      %968 = vmatpush2.bf16.msra.mxu0 0
      %969 = vmatprep.mubr.bf16.mxu0 0
      %970 = vmatmul.mubr.bf16.gmra.mxu0 %v929
      %v971 = vpop.f32.mrf.mxu0
      %v972 = vadd.f32 0.0, %v971
      %v973 = vpop.f32.mrf.mxu0
      %v974 = vadd.f32 0.0, %v973
      %v975 = vpop.f32.mrf.mxu0
      %v976 = vpop.f32.mrf.mxu0
      %977 = vdwg.mxu0
      %v978 = vadd.f32 %v889, %v972
      %v979 = vadd.f32 %v891, %v974
      %980 = vrot.lane.b32.xlu0 %v746, 127
      %v981 = vpop.permute.xlu0 %980
      %v982 = vrot.slane %v981, 4
      %vm983 = vcmask 1039360
      %v984 = vsel %vm983, %v982, %v981
      %v987 = vmul.bf16 %v740, %v984
      %v988 = vmul.bf16 %v741, %v982
      %s989 = scalar_lea.vmem %s8, 12
      %v990 = vld [vmem:[%s989] sm:$0xf]
      %v993 = vunpack.c.l.b16 %v987
      %v994 = vunpack.c.h.b16 %v987
      %v995 = vunpack.c.l.b16 %v988
      %v996 = vpack.c.b16 %v993, %v993
      %v997 = vpack.c.b16 %v994, %v994
      %v998 = vpack.c.b16 %v995, %v995
      %999 = vrot.lane.b32.xlu0 %v996, 1
      %v1000 = vpop.permute.xlu0 %999
      %1001 = vrot.lane.b32.xlu0 %v997, 1
      %v1002 = vpop.permute.xlu0 %1001
      %1003 = vrot.lane.b32.xlu0 %v998, 1
      %v1004 = vpop.permute.xlu0 %1003
      %vm1005 = vcmask 7168
      %v1006 = vsel %vm1005, %v1000, %v1002
      %v1007 = vsel %vm1005, %v1002, %v1004
      %v1009 = vsel %vm776, %v990, 0
      %v1012 = vsel %vm780, %v1006, 0
      %v1015 = vsel %vm780, %v1007, 0
      %1017 = vmatprep.subr.bf16.mxu0 0
      %1018 = vmatpush1.bf16.msra.mxu0 0
      %1019 = vmatprep.subr.bf16.mxu0 0
      %1020 = vmatpush1.bf16.msra.mxu0 0
      %1021 = vmatprep.subr.bf16.mxu0 0
      %1022 = vmatpush1.bf16.msra.mxu0 0
      %1023 = vmatprep.subr.bf16.mxu0 0
      %1024 = vmatpush1.bf16.msra.mxu0 0
      %1025 = vmatprep.subr.bf16.mxu0 0
      %1026 = vmatpush1.bf16.msra.mxu0 0
      %1027 = vmatprep.subr.bf16.mxu0 0
      %1028 = vmatpush1.bf16.msra.mxu0 0
      %1029 = vmatprep.subr.bf16.mxu0 0
      %1030 = vmatpush1.bf16.msra.mxu0 0
      %1031 = vmatprep.subr.bf16.mxu0 %v1015
      %1032 = vmatpush1.bf16.msra.mxu0 %v1012
      %1033 = vmatprep.subr.bf16.mxu0 0
      %1034 = vmatpush2.bf16.msra.mxu0 0
      %1035 = vmatprep.subr.bf16.mxu0 0
      %1036 = vmatpush2.bf16.msra.mxu0 0
      %1037 = vmatprep.subr.bf16.mxu0 0
      %1038 = vmatpush2.bf16.msra.mxu0 0
      %1039 = vmatprep.subr.bf16.mxu0 0
      %1040 = vmatpush2.bf16.msra.mxu0 0
      %1041 = vmatprep.subr.bf16.mxu0 0
      %1042 = vmatpush2.bf16.msra.mxu0 0
      %1043 = vmatprep.subr.bf16.mxu0 0
      %1044 = vmatpush2.bf16.msra.mxu0 0
      %1045 = vmatprep.subr.bf16.mxu0 0
      %1046 = vmatpush2.bf16.msra.mxu0 0
      %1047 = vmatprep.subr.bf16.mxu0 0
      %1048 = vmatpush2.bf16.msra.mxu0 0
      %1049 = vmatprep.mubr.bf16.mxu0 0
      %1050 = vmatmul.mubr.bf16.gmra.mxu0 %v1009
      %v1051 = vpop.f32.mrf.mxu0
      %v1052 = vadd.f32 0.0, %v1051
      %v1053 = vpop.f32.mrf.mxu0
      %v1054 = vadd.f32 0.0, %v1053
      %v1055 = vpop.f32.mrf.mxu0
      %v1056 = vpop.f32.mrf.mxu0
      %1057 = vdwg.mxu0
      %v1058 = vadd.f32 %v978, %v1052
      %v1059 = vadd.f32 %v979, %v1054
      %v1060 = vld [vmem:[#allocation2 + $0x4] sm:$0xff]
      %s1061 = scalar_lea.vmem %s8, 16
      %v1062 = vld [vmem:[%s1061] sm:$0xf]
      %v1064 = vunpack.c.l.b16 %v1060
      %v1065 = vunpack.c.h.b16 %v1060
      %v1066 = vpack.c.b16 %v1064, %v1064
      %v1067 = vpack.c.b16 %v1065, %v1065
      %v1069 = vsel %vm776, %v1062, 0
      %v1072 = vsel %vm780, %v1066, 0
      %v1075 = vsel %vm780, %v1067, 0
      %1077 = vmatprep.subr.bf16.mxu0 0
      %1078 = vmatpush1.bf16.msra.mxu0 0
      %1079 = vmatprep.subr.bf16.mxu0 0
      %1080 = vmatpush1.bf16.msra.mxu0 0
      %1081 = vmatprep.subr.bf16.mxu0 0
      %1082 = vmatpush1.bf16.msra.mxu0 0
      %1083 = vmatprep.subr.bf16.mxu0 0
      %1084 = vmatpush1.bf16.msra.mxu0 0
      %1085 = vmatprep.subr.bf16.mxu0 0
      %1086 = vmatpush1.bf16.msra.mxu0 0
      %1087 = vmatprep.subr.bf16.mxu0 0
      %1088 = vmatpush1.bf16.msra.mxu0 0
      %1089 = vmatprep.subr.bf16.mxu0 0
      %1090 = vmatpush1.bf16.msra.mxu0 0
      %1091 = vmatprep.subr.bf16.mxu0 %v1075
      %1092 = vmatpush1.bf16.msra.mxu0 %v1072
      %1093 = vmatprep.subr.bf16.mxu0 0
      %1094 = vmatpush2.bf16.msra.mxu0 0
      %1095 = vmatprep.subr.bf16.mxu0 0
      %1096 = vmatpush2.bf16.msra.mxu0 0
      %1097 = vmatprep.subr.bf16.mxu0 0
      %1098 = vmatpush2.bf16.msra.mxu0 0
      %1099 = vmatprep.subr.bf16.mxu0 0
      %1100 = vmatpush2.bf16.msra.mxu0 0
      %1101 = vmatprep.subr.bf16.mxu0 0
      %1102 = vmatpush2.bf16.msra.mxu0 0
      %1103 = vmatprep.subr.bf16.mxu0 0
      %1104 = vmatpush2.bf16.msra.mxu0 0
      %1105 = vmatprep.subr.bf16.mxu0 0
      %1106 = vmatpush2.bf16.msra.mxu0 0
      %1107 = vmatprep.subr.bf16.mxu0 0
      %1108 = vmatpush2.bf16.msra.mxu0 0
      %1109 = vmatprep.mubr.bf16.mxu0 0
      %1110 = vmatmul.mubr.bf16.gmra.mxu0 %v1069
      %v1111 = vpop.f32.mrf.mxu0
      %v1112 = vadd.f32 0.0, %v1111
      %v1113 = vpop.f32.mrf.mxu0
      %v1114 = vadd.f32 0.0, %v1113
      %v1115 = vpop.f32.mrf.mxu0
      %v1116 = vpop.f32.mrf.mxu0
      %1117 = vdwg.mxu0
      %v1118 = vadd.f32 %v1058, %v1112
      %v1119 = vadd.f32 %v1059, %v1114
      %v1120 = vld [vmem:[#allocation2 + $0x4] sm:$0xff]
      %v1121 = vld [vmem:[#allocation2 + $0xc] sm:$0xf]
      %1122 = vrot.lane.b32.xlu0 %v899, 1
      %v1123 = vpop.permute.xlu0 %1122
      %v1124 = vrot.slane %v1123, 4
      %v1125 = vsel %vm1005, %v1124, %v1123
      %v1128 = vmul.bf16 %v1120, %v1125
      %v1129 = vmul.bf16 %v1121, %v1124
      %s1130 = scalar_lea.vmem %s8, 20
      %v1131 = vld [vmem:[%s1130] sm:$0xf]
      %v1134 = vunpack.c.l.b16 %v1128
      %v1135 = vunpack.c.h.b16 %v1128
      %v1136 = vunpack.c.l.b16 %v1129
      %v1137 = vpack.c.b16 %v1134, %v1134
      %v1138 = vpack.c.b16 %v1135, %v1135
      %v1139 = vpack.c.b16 %v1136, %v1136
      %1140 = vrot.lane.b32.xlu0 %v1137, 127
      %v1141 = vpop.permute.xlu0 %1140
      %1142 = vrot.lane.b32.xlu0 %v1138, 127
      %v1143 = vpop.permute.xlu0 %1142
      %1144 = vrot.lane.b32.xlu0 %v1139, 127
      %v1145 = vpop.permute.xlu0 %1144
      %v1146 = vsel %vm983, %v1141, %v1143
      %v1147 = vsel %vm983, %v1143, %v1145
      %v1149 = vsel %vm776, %v1131, 0
      %v1152 = vsel %vm780, %v1146, 0
      %v1155 = vsel %vm780, %v1147, 0
      %1157 = vmatprep.subr.bf16.mxu0 0
      %1158 = vmatpush1.bf16.msra.mxu0 0
      %1159 = vmatprep.subr.bf16.mxu0 0
      %1160 = vmatpush1.bf16.msra.mxu0 0
      %1161 = vmatprep.subr.bf16.mxu0 0
      %1162 = vmatpush1.bf16.msra.mxu0 0
      %1163 = vmatprep.subr.bf16.mxu0 0
      %1164 = vmatpush1.bf16.msra.mxu0 0
      %1165 = vmatprep.subr.bf16.mxu0 0
      %1166 = vmatpush1.bf16.msra.mxu0 0
      %1167 = vmatprep.subr.bf16.mxu0 0
      %1168 = vmatpush1.bf16.msra.mxu0 0
      %1169 = vmatprep.subr.bf16.mxu0 0
      %1170 = vmatpush1.bf16.msra.mxu0 0
      %1171 = vmatprep.subr.bf16.mxu0 %v1155
      %1172 = vmatpush1.bf16.msra.mxu0 %v1152
      %1173 = vmatprep.subr.bf16.mxu0 0
      %1174 = vmatpush2.bf16.msra.mxu0 0
      %1175 = vmatprep.subr.bf16.mxu0 0
      %1176 = vmatpush2.bf16.msra.mxu0 0
      %1177 = vmatprep.subr.bf16.mxu0 0
      %1178 = vmatpush2.bf16.msra.mxu0 0
      %1179 = vmatprep.subr.bf16.mxu0 0
      %1180 = vmatpush2.bf16.msra.mxu0 0
      %1181 = vmatprep.subr.bf16.mxu0 0
      %1182 = vmatpush2.bf16.msra.mxu0 0
      %1183 = vmatprep.subr.bf16.mxu0 0
      %1184 = vmatpush2.bf16.msra.mxu0 0
      %1185 = vmatprep.subr.bf16.mxu0 0
      %1186 = vmatpush2.bf16.msra.mxu0 0
      %1187 = vmatprep.subr.bf16.mxu0 0
      %1188 = vmatpush2.bf16.msra.mxu0 0
      %1189 = vmatprep.mubr.bf16.mxu0 0
      %1190 = vmatmul.mubr.bf16.gmra.mxu0 %v1149
      %v1191 = vpop.f32.mrf.mxu0
      %v1192 = vadd.f32 0.0, %v1191
      %v1193 = vpop.f32.mrf.mxu0
      %v1194 = vadd.f32 0.0, %v1193
      %v1195 = vpop.f32.mrf.mxu0
      %v1196 = vpop.f32.mrf.mxu0
      %1197 = vdwg.mxu0
      %v1198 = vadd.f32 %v1118, %v1192
      %v1199 = vadd.f32 %v1119, %v1194
      %1200 = vrot.lane.b32.xlu0 %v746, 15
      %v1201 = vpop.permute.xlu0 %1200
      %v1202 = vrot.slane %v1201, 4
      %v1203 = vsel %vm925, %v1202, %v1201
      %v1206 = vmul.bf16 %v1120, %v1203
      %v1207 = vmul.bf16 %v1121, %v1202
      %s1208 = scalar_lea.vmem %s8, 24
      %v1209 = vld [vmem:[%s1208] sm:$0xf]
      %v1212 = vunpack.c.l.b16 %v1206
      %v1213 = vunpack.c.h.b16 %v1206
      %v1214 = vunpack.c.l.b16 %v1207
      %v1215 = vpack.c.b16 %v1212, %v1212
      %v1216 = vpack.c.b16 %v1213, %v1213
      %v1217 = vpack.c.b16 %v1214, %v1214
      %1218 = vrot.lane.b32.xlu0 %v1215, 113
      %v1219 = vpop.permute.xlu0 %1218
      %1220 = vrot.lane.b32.xlu0 %v1216, 113
      %v1221 = vpop.permute.xlu0 %1220
      %1222 = vrot.lane.b32.xlu0 %v1217, 113
      %v1223 = vpop.permute.xlu0 %1222
      %v1224 = vsel %vm903, %v1219, %v1221
      %v1225 = vsel %vm903, %v1221, %v1223
      %v1227 = vsel %vm776, %v1209, 0
      %v1230 = vsel %vm780, %v1224, 0
      %v1233 = vsel %vm780, %v1225, 0
      %1235 = vmatprep.subr.bf16.mxu0 0
      %1236 = vmatpush1.bf16.msra.mxu0 0
      %1237 = vmatprep.subr.bf16.mxu0 0
      %1238 = vmatpush1.bf16.msra.mxu0 0
      %1239 = vmatprep.subr.bf16.mxu0 0
      %1240 = vmatpush1.bf16.msra.mxu0 0
      %1241 = vmatprep.subr.bf16.mxu0 0
      %1242 = vmatpush1.bf16.msra.mxu0 0
      %1243 = vmatprep.subr.bf16.mxu0 0
      %1244 = vmatpush1.bf16.msra.mxu0 0
      %1245 = vmatprep.subr.bf16.mxu0 0
      %1246 = vmatpush1.bf16.msra.mxu0 0
      %1247 = vmatprep.subr.bf16.mxu0 0
      %1248 = vmatpush1.bf16.msra.mxu0 0
      %1249 = vmatprep.subr.bf16.mxu0 %v1233
      %1250 = vmatpush1.bf16.msra.mxu0 %v1230
      %1251 = vmatprep.subr.bf16.mxu0 0
      %1252 = vmatpush2.bf16.msra.mxu0 0
      %1253 = vmatprep.subr.bf16.mxu0 0
      %1254 = vmatpush2.bf16.msra.mxu0 0
      %1255 = vmatprep.subr.bf16.mxu0 0
      %1256 = vmatpush2.bf16.msra.mxu0 0
      %1257 = vmatprep.subr.bf16.mxu0 0
      %1258 = vmatpush2.bf16.msra.mxu0 0
      %1259 = vmatprep.subr.bf16.mxu0 0
      %1260 = vmatpush2.bf16.msra.mxu0 0
      %1261 = vmatprep.subr.bf16.mxu0 0
      %1262 = vmatpush2.bf16.msra.mxu0 0
      %1263 = vmatprep.subr.bf16.mxu0 0
      %1264 = vmatpush2.bf16.msra.mxu0 0
      %1265 = vmatprep.subr.bf16.mxu0 0
      %1266 = vmatpush2.bf16.msra.mxu0 0
      %1267 = vmatprep.mubr.bf16.mxu0 0
      %1268 = vmatmul.mubr.bf16.gmra.mxu0 %v1227
      %v1269 = vpop.f32.mrf.mxu0
      %v1270 = vadd.f32 0.0, %v1269
      %v1271 = vpop.f32.mrf.mxu0
      %v1272 = vadd.f32 0.0, %v1271
      %v1273 = vpop.f32.mrf.mxu0
      %v1274 = vpop.f32.mrf.mxu0
      %1275 = vdwg.mxu0
      %v1276 = vadd.f32 %v1198, %v1270
      %v1277 = vadd.f32 %v1199, %v1272
      %s1278 = scalar_lea.vmem %s8, 28
      %v1279 = vld [vmem:[%s1278] sm:$0xf]
      %v1282 = vunpack.c.l.b16 %v1120
      %v1283 = vunpack.c.h.b16 %v1120
      %v1284 = vunpack.c.l.b16 %v1121
      %v1285 = vpack.c.b16 %v1282, %v1282
      %v1286 = vpack.c.b16 %v1283, %v1283
      %v1287 = vpack.c.b16 %v1284, %v1284
      %1288 = vrot.lane.b32.xlu0 %v1285, 112
      %v1289 = vpop.permute.xlu0 %1288
      %1290 = vrot.lane.b32.xlu0 %v1286, 112
      %v1291 = vpop.permute.xlu0 %1290
      %1292 = vrot.lane.b32.xlu0 %v1287, 112
      %v1293 = vpop.permute.xlu0 %1292
      %vm1294 = vcmask 916480
      %v1295 = vsel %vm1294, %v1289, %v1291
      %v1296 = vsel %vm1294, %v1291, %v1293
      %v1298 = vsel %vm776, %v1279, 0
      %v1301 = vsel %vm780, %v1295, 0
      %v1304 = vsel %vm780, %v1296, 0
      %1306 = vmatprep.subr.bf16.mxu0 0
      %1307 = vmatpush1.bf16.msra.mxu0 0
      %1308 = vmatprep.subr.bf16.mxu0 0
      %1309 = vmatpush1.bf16.msra.mxu0 0
      %1310 = vmatprep.subr.bf16.mxu0 0
      %1311 = vmatpush1.bf16.msra.mxu0 0
      %1312 = vmatprep.subr.bf16.mxu0 0
      %1313 = vmatpush1.bf16.msra.mxu0 0
      %1314 = vmatprep.subr.bf16.mxu0 0
      %1315 = vmatpush1.bf16.msra.mxu0 0
      %1316 = vmatprep.subr.bf16.mxu0 0
      %1317 = vmatpush1.bf16.msra.mxu0 0
      %1318 = vmatprep.subr.bf16.mxu0 0
      %1319 = vmatpush1.bf16.msra.mxu0 0
      %1320 = vmatprep.subr.bf16.mxu0 %v1304
      %1321 = vmatpush1.bf16.msra.mxu0 %v1301
      %1322 = vmatprep.subr.bf16.mxu0 0
      %1323 = vmatpush2.bf16.msra.mxu0 0
      %1324 = vmatprep.subr.bf16.mxu0 0
      %1325 = vmatpush2.bf16.msra.mxu0 0
      %1326 = vmatprep.subr.bf16.mxu0 0
      %1327 = vmatpush2.bf16.msra.mxu0 0
      %1328 = vmatprep.subr.bf16.mxu0 0
      %1329 = vmatpush2.bf16.msra.mxu0 0
      %1330 = vmatprep.subr.bf16.mxu0 0
      %1331 = vmatpush2.bf16.msra.mxu0 0
      %1332 = vmatprep.subr.bf16.mxu0 0
      %1333 = vmatpush2.bf16.msra.mxu0 0
      %1334 = vmatprep.subr.bf16.mxu0 0
      %1335 = vmatpush2.bf16.msra.mxu0 0
      %1336 = vmatprep.subr.bf16.mxu0 0
      %1337 = vmatpush2.bf16.msra.mxu0 0
      %1338 = vmatprep.mubr.bf16.mxu0 0
      %1339 = vmatmul.mubr.bf16.gmra.mxu0 %v1298
      %v1340 = vpop.f32.mrf.mxu0
      %v1341 = vadd.f32 0.0, %v1340
      %v1342 = vpop.f32.mrf.mxu0
      %v1343 = vadd.f32 0.0, %v1342
      %v1344 = vpop.f32.mrf.mxu0
      %v1345 = vpop.f32.mrf.mxu0
      %1346 = vdwg.mxu0
      %v1347 = vadd.f32 %v1276, %v1341
      %v1348 = vadd.f32 %v1277, %v1343
      %1349 = vrot.lane.b32.xlu0 %v899, 17
      %v1350 = vpop.permute.xlu0 %1349
      %v1351 = vrot.slane %v1350, 4
      %v1352 = vsel %vm842, %v1351, %v1350
      %v1355 = vmul.bf16 %v1120, %v1352
      %v1356 = vmul.bf16 %v1121, %v1351
      %s1357 = scalar_lea.vmem %s8, 32
      %v1358 = vld [vmem:[%s1357] sm:$0xf]
      %v1361 = vunpack.c.l.b16 %v1355
      %v1362 = vunpack.c.h.b16 %v1355
      %v1363 = vunpack.c.l.b16 %v1356
      %v1364 = vpack.c.b16 %v1361, %v1361
      %v1365 = vpack.c.b16 %v1362, %v1362
      %v1366 = vpack.c.b16 %v1363, %v1363
      %1367 = vrot.lane.b32.xlu0 %v1364, 111
      %v1368 = vpop.permute.xlu0 %1367
      %1369 = vrot.lane.b32.xlu0 %v1365, 111
      %v1370 = vpop.permute.xlu0 %1369
      %1371 = vrot.lane.b32.xlu0 %v1366, 111
      %v1372 = vpop.permute.xlu0 %1371
      %v1373 = vsel %vm750, %v1368, %v1370
      %v1374 = vsel %vm750, %v1370, %v1372
      %v1376 = vsel %vm776, %v1358, 0
      %v1379 = vsel %vm780, %v1373, 0
      %v1382 = vsel %vm780, %v1374, 0
      %1384 = vmatprep.subr.bf16.mxu0 0
      %1385 = vmatpush1.bf16.msra.mxu0 0
      %1386 = vmatprep.subr.bf16.mxu0 0
      %1387 = vmatpush1.bf16.msra.mxu0 0
      %1388 = vmatprep.subr.bf16.mxu0 0
      %1389 = vmatpush1.bf16.msra.mxu0 0
      %1390 = vmatprep.subr.bf16.mxu0 0
      %1391 = vmatpush1.bf16.msra.mxu0 0
      %1392 = vmatprep.subr.bf16.mxu0 0
      %1393 = vmatpush1.bf16.msra.mxu0 0
      %1394 = vmatprep.subr.bf16.mxu0 0
      %1395 = vmatpush1.bf16.msra.mxu0 0
      %1396 = vmatprep.subr.bf16.mxu0 0
      %1397 = vmatpush1.bf16.msra.mxu0 0
      %1398 = vmatprep.subr.bf16.mxu0 %v1382
      %1399 = vmatpush1.bf16.msra.mxu0 %v1379
      %1400 = vmatprep.subr.bf16.mxu0 0
      %1401 = vmatpush2.bf16.msra.mxu0 0
      %1402 = vmatprep.subr.bf16.mxu0 0
      %1403 = vmatpush2.bf16.msra.mxu0 0
      %1404 = vmatprep.subr.bf16.mxu0 0
      %1405 = vmatpush2.bf16.msra.mxu0 0
      %1406 = vmatprep.subr.bf16.mxu0 0
      %1407 = vmatpush2.bf16.msra.mxu0 0
      %1408 = vmatprep.subr.bf16.mxu0 0
      %1409 = vmatpush2.bf16.msra.mxu0 0
      %1410 = vmatprep.subr.bf16.mxu0 0
      %1411 = vmatpush2.bf16.msra.mxu0 0
      %1412 = vmatprep.subr.bf16.mxu0 0
      %1413 = vmatpush2.bf16.msra.mxu0 0
      %1414 = vmatprep.subr.bf16.mxu0 0
      %1415 = vmatpush2.bf16.msra.mxu0 0
      %1416 = vmatprep.mubr.bf16.mxu0 0
      %1417 = vmatmul.mubr.bf16.gmra.mxu0 %v1376
      %v1418 = vpop.f32.mrf.mxu0
      %v1419 = vadd.f32 0.0, %v1418
      %v1420 = vpop.f32.mrf.mxu0
      %v1421 = vadd.f32 0.0, %v1420
      %v1422 = vpop.f32.mrf.mxu0
      %v1423 = vpop.f32.mrf.mxu0
      %1424 = vdwg.mxu0
      %v1425 = vadd.f32 %v1347, %v1419
      %v1426 = vadd.f32 %v1348, %v1421
      %v1427 = vld [vmem:[%s9] sm:$0xff]
      %1429 = vset.pattern.permute.xlu0 0
      %1430 = vperm.xlu0 %1429, %v1427
      %v1431 = vpop.permute.xlu0 %1430
      %v1433 = vadd.f32 %v1425, %v1431
      %v1434 = vadd.f32 %v1426, %v1431
      %vm1435 = vcmp.ge.f32.partialorder %v1433, 0.0
      %vm1436 = vcmp.ge.f32.partialorder %v1434, 0.0
      %v1437 = vmul.f32 %v1433, 0.2
      %v1438 = vmul.f32 %v1434, 0.2
      %v1439 = vsel %vm1435, %v1433, %v1437
      %v1440 = vsel %vm1436, %v1434, %v1438
      %v1441 = vld [vmem:[%s10] sm:$0xff]
      %v1443 = vlaneseq
      %v1444 = vshrl.u32 %v1443, 7
      %v1445 = vsub.s32 0, %v1444
      %v1446 = vrot.slane %v525, %v1445
      %v1448 = vmul.f32 %v1441, %v1446
      %v1449 = vsel %vm776, %v1448, 0.0
      %1450 = vadd.xlane.f32.xlu0 %v1449
      %v1451 = vpop.xlane.xlu0 %1450
      %v1452 = vld [vmem:[%s11] sm:$0xff]
      %v1453 = vadd.f32 %v1451, %v1452
      %v1454 = vmul.f32 %v1453, 0.11785113
      %v1455 = vld [vmem:[%s13] sm:$0xff]
      %v1456 = vmul.f32 %v1454, %v1454
      %v1458 = vsel %vm776, %v1455, 0
      %1460 = vmatprep.subr.mxu0 0.0
      %1461 = vmatpush1.msra.mxu0 0.0
      %1462 = vmatprep.subr.mxu0 0.0
      %1463 = vmatpush1.msra.mxu0 0.0
      %1464 = vmatprep.subr.mxu0 0.0
      %1465 = vmatpush1.msra.mxu0 0.0
      %1466 = vmatprep.subr.mxu0 0.0
      %1467 = vmatpush1.msra.mxu0 0.0
      %1468 = vmatprep.subr.mxu0 0.0
      %1469 = vmatpush1.msra.mxu0 0.0
      %1470 = vmatprep.subr.mxu0 0.0
      %1471 = vmatpush1.msra.mxu0 0.0
      %1472 = vmatprep.subr.mxu0 0.0
      %1473 = vmatpush1.msra.mxu0 0.0
      %1474 = vmatprep.subr.mxu0 0.0
      %1475 = vmatpush1.msra.mxu0 0.0
      %1476 = vmatprep.subr.mxu0 0.0
      %1477 = vmatpush1.msra.mxu0 0.0
      %1478 = vmatprep.subr.mxu0 0.0
      %1479 = vmatpush1.msra.mxu0 0.0
      %1480 = vmatprep.subr.mxu0 0.0
      %1481 = vmatpush1.msra.mxu0 0.0
      %1482 = vmatprep.subr.mxu0 0.0
      %1483 = vmatpush1.msra.mxu0 0.0
      %1484 = vmatprep.subr.mxu0 0.0
      %1485 = vmatpush1.msra.mxu0 0.0
      %1486 = vmatprep.subr.mxu0 0.0
      %1487 = vmatpush1.msra.mxu0 0.0
      %1488 = vmatprep.subr.mxu0 0.0
      %1489 = vmatpush1.msra.mxu0 0.0
      %1490 = vmatprep.subr.mxu0 0.0
      %1491 = vmatpush1.msra.mxu0 %v1456
      %1492 = vmatprep.subr.mxu0 0.0
      %1493 = vmatpush2.msra.mxu0 0.0
      %1494 = vmatprep.subr.mxu0 0.0
      %1495 = vmatpush2.msra.mxu0 0.0
      %1496 = vmatprep.subr.mxu0 0.0
      %1497 = vmatpush2.msra.mxu0 0.0
      %1498 = vmatprep.subr.mxu0 0.0
      %1499 = vmatpush2.msra.mxu0 0.0
      %1500 = vmatprep.subr.mxu0 0.0
      %1501 = vmatpush2.msra.mxu0 0.0
      %1502 = vmatprep.subr.mxu0 0.0
      %1503 = vmatpush2.msra.mxu0 0.0
      %1504 = vmatprep.subr.mxu0 0.0
      %1505 = vmatpush2.msra.mxu0 0.0
      %1506 = vmatprep.subr.mxu0 0.0
      %1507 = vmatpush2.msra.mxu0 0.0
      %1508 = vmatprep.subr.mxu0 0.0
      %1509 = vmatpush2.msra.mxu0 0.0
      %1510 = vmatprep.subr.mxu0 0.0
      %1511 = vmatpush2.msra.mxu0 0.0
      %1512 = vmatprep.subr.mxu0 0.0
      %1513 = vmatpush2.msra.mxu0 0.0
      %1514 = vmatprep.subr.mxu0 0.0
      %1515 = vmatpush2.msra.mxu0 0.0
      %1516 = vmatprep.subr.mxu0 0.0
      %1517 = vmatpush2.msra.mxu0 0.0
      %1518 = vmatprep.subr.mxu0 0.0
      %1519 = vmatpush2.msra.mxu0 0.0
      %1520 = vmatprep.subr.mxu0 0.0
      %1521 = vmatpush2.msra.mxu0 0.0
      %1522 = vmatprep.subr.mxu0 0.0
      %1523 = vmatpush2.msra.mxu0 0.0
      %1524 = vmatprep.mubr.f32.mxu0 0.0
      %1525 = vmatmul.mubr.f32.gmra.mxu0 %v1458
      %v1526 = vpop.f32.mrf.mxu0
      %v1527 = vadd.f32 1e-08, %v1526
      %v1528 = vpop.f32.mrf.mxu0
      %1529 = vdwg.mxu0
      %v1530 = vrsqrt.pop %v1527
      %1532 = vset.pattern.permute.xlu0 0
      %1533 = vperm.xlu0 %1532, %v1454
      %v1534 = vpop.permute.xlu0 %1533
      %v1536 = vmul.f32 %v1439, %v1534
      %v1537 = vmul.f32 %v1440, %v1534
      %v1538 = vpack.c.bf16 %v1536, %v1536
      %v1539 = vpack.c.bf16 %v1537, %v1537
      %v1542 = vunpack.c.l.b16 %v1538
      %v1543 = vunpack.c.l.b16 %v1539
      %v1544 = vpack.c.b16 %v1543, %v1542
      %1546 = vst [vmem:[#allocation2 + $0x4] sm:$0xff] %v1544
      %v1547 = vld [vmem:[#allocation2] sm:$0xff]
      %v1548 = vld [vmem:[#allocation2 + $0x8] sm:$0xf]
      %v1549 = vmul.bf16 %v1547, %v751
      %v1550 = vmul.bf16 %v1548, %v749
      %v1551 = vld [vmem:[%s12] sm:$0xf]
      %s1552 = scalar_lea.vmem %s12, 4
      %v1553 = vld [vmem:[%s1552] sm:$0xf]
      %v1556 = vunpack.c.l.b16 %v1547
      %v1557 = vunpack.c.h.b16 %v1547
      %v1558 = vunpack.c.l.b16 %v1548
      %v1559 = vpack.c.b16 %v1556, %v1556
      %v1560 = vpack.c.b16 %v1557, %v1557
      %v1561 = vpack.c.b16 %v1558, %v1558
      %1562 = vrot.lane.b32.xlu0 %v1559, 16
      %v1563 = vpop.permute.xlu0 %1562
      %1564 = vrot.lane.b32.xlu0 %v1560, 16
      %v1565 = vpop.permute.xlu0 %1564
      %1566 = vrot.lane.b32.xlu0 %v1561, 16
      %v1567 = vpop.permute.xlu0 %1566
      %v1568 = vsel %vm773, %v1563, %v1565
      %v1569 = vsel %vm773, %v1565, %v1567
      %v1571 = vsel %vm776, %v1553, 0
      %v1574 = vsel %vm780, %v1568, 0
      %v1577 = vsel %vm780, %v1569, 0
      %1579 = vmatprep.subr.bf16.mxu0 0
      %1580 = vmatpush1.bf16.msra.mxu0 0
      %1581 = vmatprep.subr.bf16.mxu0 0
      %1582 = vmatpush1.bf16.msra.mxu0 0
      %1583 = vmatprep.subr.bf16.mxu0 0
      %1584 = vmatpush1.bf16.msra.mxu0 0
      %1585 = vmatprep.subr.bf16.mxu0 0
      %1586 = vmatpush1.bf16.msra.mxu0 0
      %1587 = vmatprep.subr.bf16.mxu0 0
      %1588 = vmatpush1.bf16.msra.mxu0 0
      %1589 = vmatprep.subr.bf16.mxu0 0
      %1590 = vmatpush1.bf16.msra.mxu0 0
      %1591 = vmatprep.subr.bf16.mxu0 0
      %1592 = vmatpush1.bf16.msra.mxu0 0
      %1593 = vmatprep.subr.bf16.mxu0 %v1577
      %1594 = vmatpush1.bf16.msra.mxu0 %v1574
      %1595 = vmatprep.subr.bf16.mxu0 0
      %1596 = vmatpush2.bf16.msra.mxu0 0
      %1597 = vmatprep.subr.bf16.mxu0 0
      %1598 = vmatpush2.bf16.msra.mxu0 0
      %1599 = vmatprep.subr.bf16.mxu0 0
      %1600 = vmatpush2.bf16.msra.mxu0 0
      %1601 = vmatprep.subr.bf16.mxu0 0
      %1602 = vmatpush2.bf16.msra.mxu0 0
      %1603 = vmatprep.subr.bf16.mxu0 0
      %1604 = vmatpush2.bf16.msra.mxu0 0
      %1605 = vmatprep.subr.bf16.mxu0 0
      %1606 = vmatpush2.bf16.msra.mxu0 0
      %1607 = vmatprep.subr.bf16.mxu0 0
      %1608 = vmatpush2.bf16.msra.mxu0 0
      %1609 = vmatprep.subr.bf16.mxu0 0
      %1610 = vmatpush2.bf16.msra.mxu0 0
      %1611 = vmatprep.mubr.bf16.mxu0 0
      %1612 = vmatmul.mubr.bf16.gmra.mxu0 %v1571
      %v1613 = vpop.f32.mrf.mxu0
      %v1614 = vadd.f32 0.0, %v1613
      %v1615 = vpop.f32.mrf.mxu0
      %v1616 = vadd.f32 0.0, %v1615
      %v1617 = vpop.f32.mrf.mxu0
      %v1618 = vpop.f32.mrf.mxu0
      %1619 = vdwg.mxu0
      %v1622 = vunpack.c.l.b16 %v1549
      %v1623 = vunpack.c.h.b16 %v1549
      %v1624 = vunpack.c.l.b16 %v1550
      %v1625 = vpack.c.b16 %v1622, %v1622
      %v1626 = vpack.c.b16 %v1623, %v1623
      %v1627 = vpack.c.b16 %v1624, %v1624
      %1628 = vrot.lane.b32.xlu0 %v1625, 17
      %v1629 = vpop.permute.xlu0 %1628
      %1630 = vrot.lane.b32.xlu0 %v1626, 17
      %v1631 = vpop.permute.xlu0 %1630
      %1632 = vrot.lane.b32.xlu0 %v1627, 17
      %v1633 = vpop.permute.xlu0 %1632
      %v1634 = vsel %vm842, %v1629, %v1631
      %v1635 = vsel %vm842, %v1631, %v1633
      %v1637 = vsel %vm776, %v1551, 0
      %v1640 = vsel %vm780, %v1634, 0
      %v1643 = vsel %vm780, %v1635, 0
      %1645 = vmatprep.subr.bf16.mxu0 0
      %1646 = vmatpush1.bf16.msra.mxu0 0
      %1647 = vmatprep.subr.bf16.mxu0 0
      %1648 = vmatpush1.bf16.msra.mxu0 0
      %1649 = vmatprep.subr.bf16.mxu0 0
      %1650 = vmatpush1.bf16.msra.mxu0 0
      %1651 = vmatprep.subr.bf16.mxu0 0
      %1652 = vmatpush1.bf16.msra.mxu0 0
      %1653 = vmatprep.subr.bf16.mxu0 0
      %1654 = vmatpush1.bf16.msra.mxu0 0
      %1655 = vmatprep.subr.bf16.mxu0 0
      %1656 = vmatpush1.bf16.msra.mxu0 0
      %1657 = vmatprep.subr.bf16.mxu0 0
      %1658 = vmatpush1.bf16.msra.mxu0 0
      %1659 = vmatprep.subr.bf16.mxu0 %v1643
      %1660 = vmatpush1.bf16.msra.mxu0 %v1640
      %1661 = vmatprep.subr.bf16.mxu0 0
      %1662 = vmatpush2.bf16.msra.mxu0 0
      %1663 = vmatprep.subr.bf16.mxu0 0
      %1664 = vmatpush2.bf16.msra.mxu0 0
      %1665 = vmatprep.subr.bf16.mxu0 0
      %1666 = vmatpush2.bf16.msra.mxu0 0
      %1667 = vmatprep.subr.bf16.mxu0 0
      %1668 = vmatpush2.bf16.msra.mxu0 0
      %1669 = vmatprep.subr.bf16.mxu0 0
      %1670 = vmatpush2.bf16.msra.mxu0 0
      %1671 = vmatprep.subr.bf16.mxu0 0
      %1672 = vmatpush2.bf16.msra.mxu0 0
      %1673 = vmatprep.subr.bf16.mxu0 0
      %1674 = vmatpush2.bf16.msra.mxu0 0
      %1675 = vmatprep.subr.bf16.mxu0 0
      %1676 = vmatpush2.bf16.msra.mxu0 0
      %1677 = vmatprep.mubr.bf16.mxu0 0
      %1678 = vmatmul.mubr.bf16.gmra.mxu0 %v1637
      %v1679 = vpop.f32.mrf.mxu0
      %v1680 = vadd.f32 %v1614, %v1679
      %v1681 = vpop.f32.mrf.mxu0
      %v1682 = vadd.f32 %v1616, %v1681
      %v1683 = vpop.f32.mrf.mxu0
      %v1684 = vpop.f32.mrf.mxu0
      %1685 = vdwg.mxu0
      %v1686 = vmul.bf16 %v1547, %v904
      %v1687 = vmul.bf16 %v1548, %v902
      %s1688 = scalar_lea.vmem %s12, 8
      %v1689 = vld [vmem:[%s1688] sm:$0xf]
      %v1692 = vunpack.c.l.b16 %v1686
      %v1693 = vunpack.c.h.b16 %v1686
      %v1694 = vunpack.c.l.b16 %v1687
      %v1695 = vpack.c.b16 %v1692, %v1692
      %v1696 = vpack.c.b16 %v1693, %v1693
      %v1697 = vpack.c.b16 %v1694, %v1694
      %1698 = vrot.lane.b32.xlu0 %v1695, 15
      %v1699 = vpop.permute.xlu0 %1698
      %1700 = vrot.lane.b32.xlu0 %v1696, 15
      %v1701 = vpop.permute.xlu0 %1700
      %1702 = vrot.lane.b32.xlu0 %v1697, 15
      %v1703 = vpop.permute.xlu0 %1702
      %v1704 = vsel %vm925, %v1699, %v1701
      %v1705 = vsel %vm925, %v1701, %v1703
      %v1707 = vsel %vm776, %v1689, 0
      %v1710 = vsel %vm780, %v1704, 0
      %v1713 = vsel %vm780, %v1705, 0
      %1715 = vmatprep.subr.bf16.mxu0 0
      %1716 = vmatpush1.bf16.msra.mxu0 0
      %1717 = vmatprep.subr.bf16.mxu0 0
      %1718 = vmatpush1.bf16.msra.mxu0 0
      %1719 = vmatprep.subr.bf16.mxu0 0
      %1720 = vmatpush1.bf16.msra.mxu0 0
      %1721 = vmatprep.subr.bf16.mxu0 0
      %1722 = vmatpush1.bf16.msra.mxu0 0
      %1723 = vmatprep.subr.bf16.mxu0 0
      %1724 = vmatpush1.bf16.msra.mxu0 0
      %1725 = vmatprep.subr.bf16.mxu0 0
      %1726 = vmatpush1.bf16.msra.mxu0 0
      %1727 = vmatprep.subr.bf16.mxu0 0
      %1728 = vmatpush1.bf16.msra.mxu0 0
      %1729 = vmatprep.subr.bf16.mxu0 %v1713
      %1730 = vmatpush1.bf16.msra.mxu0 %v1710
      %1731 = vmatprep.subr.bf16.mxu0 0
      %1732 = vmatpush2.bf16.msra.mxu0 0
      %1733 = vmatprep.subr.bf16.mxu0 0
      %1734 = vmatpush2.bf16.msra.mxu0 0
      %1735 = vmatprep.subr.bf16.mxu0 0
      %1736 = vmatpush2.bf16.msra.mxu0 0
      %1737 = vmatprep.subr.bf16.mxu0 0
      %1738 = vmatpush2.bf16.msra.mxu0 0
      %1739 = vmatprep.subr.bf16.mxu0 0
      %1740 = vmatpush2.bf16.msra.mxu0 0
      %1741 = vmatprep.subr.bf16.mxu0 0
      %1742 = vmatpush2.bf16.msra.mxu0 0
      %1743 = vmatprep.subr.bf16.mxu0 0
      %1744 = vmatpush2.bf16.msra.mxu0 0
      %1745 = vmatprep.subr.bf16.mxu0 0
      %1746 = vmatpush2.bf16.msra.mxu0 0
      %1747 = vmatprep.mubr.bf16.mxu0 0
      %1748 = vmatmul.mubr.bf16.gmra.mxu0 %v1707
      %v1749 = vpop.f32.mrf.mxu0
      %v1750 = vadd.f32 0.0, %v1749
      %v1751 = vpop.f32.mrf.mxu0
      %v1752 = vadd.f32 0.0, %v1751
      %v1753 = vpop.f32.mrf.mxu0
      %v1754 = vpop.f32.mrf.mxu0
      %1755 = vdwg.mxu0
      %v1756 = vadd.f32 %v1680, %v1750
      %v1757 = vadd.f32 %v1682, %v1752
      %v1758 = vmul.bf16 %v1547, %v984
      %v1759 = vmul.bf16 %v1548, %v982
      %s1760 = scalar_lea.vmem %s12, 12
      %v1761 = vld [vmem:[%s1760] sm:$0xf]
      %v1764 = vunpack.c.l.b16 %v1758
      %v1765 = vunpack.c.h.b16 %v1758
      %v1766 = vunpack.c.l.b16 %v1759
      %v1767 = vpack.c.b16 %v1764, %v1764
      %v1768 = vpack.c.b16 %v1765, %v1765
      %v1769 = vpack.c.b16 %v1766, %v1766
      %1770 = vrot.lane.b32.xlu0 %v1767, 1
      %v1771 = vpop.permute.xlu0 %1770
      %1772 = vrot.lane.b32.xlu0 %v1768, 1
      %v1773 = vpop.permute.xlu0 %1772
      %1774 = vrot.lane.b32.xlu0 %v1769, 1
      %v1775 = vpop.permute.xlu0 %1774
      %v1776 = vsel %vm1005, %v1771, %v1773
      %v1777 = vsel %vm1005, %v1773, %v1775
      %v1779 = vsel %vm776, %v1761, 0
      %v1782 = vsel %vm780, %v1776, 0
      %v1785 = vsel %vm780, %v1777, 0
      %1787 = vmatprep.subr.bf16.mxu0 0
      %1788 = vmatpush1.bf16.msra.mxu0 0
      %1789 = vmatprep.subr.bf16.mxu0 0
      %1790 = vmatpush1.bf16.msra.mxu0 0
      %1791 = vmatprep.subr.bf16.mxu0 0
      %1792 = vmatpush1.bf16.msra.mxu0 0
      %1793 = vmatprep.subr.bf16.mxu0 0
      %1794 = vmatpush1.bf16.msra.mxu0 0
      %1795 = vmatprep.subr.bf16.mxu0 0
      %1796 = vmatpush1.bf16.msra.mxu0 0
      %1797 = vmatprep.subr.bf16.mxu0 0
      %1798 = vmatpush1.bf16.msra.mxu0 0
      %1799 = vmatprep.subr.bf16.mxu0 0
      %1800 = vmatpush1.bf16.msra.mxu0 0
      %1801 = vmatprep.subr.bf16.mxu0 %v1785
      %1802 = vmatpush1.bf16.msra.mxu0 %v1782
      %1803 = vmatprep.subr.bf16.mxu0 0
      %1804 = vmatpush2.bf16.msra.mxu0 0
      %1805 = vmatprep.subr.bf16.mxu0 0
      %1806 = vmatpush2.bf16.msra.mxu0 0
      %1807 = vmatprep.subr.bf16.mxu0 0
      %1808 = vmatpush2.bf16.msra.mxu0 0
      %1809 = vmatprep.subr.bf16.mxu0 0
      %1810 = vmatpush2.bf16.msra.mxu0 0
      %1811 = vmatprep.subr.bf16.mxu0 0
      %1812 = vmatpush2.bf16.msra.mxu0 0
      %1813 = vmatprep.subr.bf16.mxu0 0
      %1814 = vmatpush2.bf16.msra.mxu0 0
      %1815 = vmatprep.subr.bf16.mxu0 0
      %1816 = vmatpush2.bf16.msra.mxu0 0
      %1817 = vmatprep.subr.bf16.mxu0 0
      %1818 = vmatpush2.bf16.msra.mxu0 0
      %1819 = vmatprep.mubr.bf16.mxu0 0
      %1820 = vmatmul.mubr.bf16.gmra.mxu0 %v1779
      %v1821 = vpop.f32.mrf.mxu0
      %v1822 = vadd.f32 0.0, %v1821
      %v1823 = vpop.f32.mrf.mxu0
      %v1824 = vadd.f32 0.0, %v1823
      %v1825 = vpop.f32.mrf.mxu0
      %v1826 = vpop.f32.mrf.mxu0
      %1827 = vdwg.mxu0
      %v1828 = vadd.f32 %v1756, %v1822
      %v1829 = vadd.f32 %v1757, %v1824
      %v1830 = vld [vmem:[#allocation2 + $0x4] sm:$0xff]
      %s1831 = scalar_lea.vmem %s12, 16
      %v1832 = vld [vmem:[%s1831] sm:$0xf]
      %v1834 = vunpack.c.l.b16 %v1830
      %v1835 = vunpack.c.h.b16 %v1830
      %v1836 = vpack.c.b16 %v1834, %v1834
      %v1837 = vpack.c.b16 %v1835, %v1835
      %v1839 = vsel %vm776, %v1832, 0
      %v1842 = vsel %vm780, %v1836, 0
      %v1845 = vsel %vm780, %v1837, 0
      %1847 = vmatprep.subr.bf16.mxu0 0
      %1848 = vmatpush1.bf16.msra.mxu0 0
      %1849 = vmatprep.subr.bf16.mxu0 0
      %1850 = vmatpush1.bf16.msra.mxu0 0
      %1851 = vmatprep.subr.bf16.mxu0 0
      %1852 = vmatpush1.bf16.msra.mxu0 0
      %1853 = vmatprep.subr.bf16.mxu0 0
      %1854 = vmatpush1.bf16.msra.mxu0 0
      %1855 = vmatprep.subr.bf16.mxu0 0
      %1856 = vmatpush1.bf16.msra.mxu0 0
      %1857 = vmatprep.subr.bf16.mxu0 0
      %1858 = vmatpush1.bf16.msra.mxu0 0
      %1859 = vmatprep.subr.bf16.mxu0 0
      %1860 = vmatpush1.bf16.msra.mxu0 0
      %1861 = vmatprep.subr.bf16.mxu0 %v1845
      %1862 = vmatpush1.bf16.msra.mxu0 %v1842
      %1863 = vmatprep.subr.bf16.mxu0 0
      %1864 = vmatpush2.bf16.msra.mxu0 0
      %1865 = vmatprep.subr.bf16.mxu0 0
      %1866 = vmatpush2.bf16.msra.mxu0 0
      %1867 = vmatprep.subr.bf16.mxu0 0
      %1868 = vmatpush2.bf16.msra.mxu0 0
      %1869 = vmatprep.subr.bf16.mxu0 0
      %1870 = vmatpush2.bf16.msra.mxu0 0
      %1871 = vmatprep.subr.bf16.mxu0 0
      %1872 = vmatpush2.bf16.msra.mxu0 0
      %1873 = vmatprep.subr.bf16.mxu0 0
      %1874 = vmatpush2.bf16.msra.mxu0 0
      %1875 = vmatprep.subr.bf16.mxu0 0
      %1876 = vmatpush2.bf16.msra.mxu0 0
      %1877 = vmatprep.subr.bf16.mxu0 0
      %1878 = vmatpush2.bf16.msra.mxu0 0
      %1879 = vmatprep.mubr.bf16.mxu0 0
      %1880 = vmatmul.mubr.bf16.gmra.mxu0 %v1839
      %v1881 = vpop.f32.mrf.mxu0
      %v1882 = vadd.f32 0.0, %v1881
      %v1883 = vpop.f32.mrf.mxu0
      %v1884 = vadd.f32 0.0, %v1883
      %v1885 = vpop.f32.mrf.mxu0
      %v1886 = vpop.f32.mrf.mxu0
      %1887 = vdwg.mxu0
      %v1888 = vadd.f32 %v1828, %v1882
      %v1889 = vadd.f32 %v1829, %v1884
      %v1890 = vld [vmem:[#allocation2 + $0x4] sm:$0xff]
      %v1891 = vld [vmem:[#allocation2 + $0xc] sm:$0xf]
      %v1892 = vmul.bf16 %v1890, %v1125
      %v1893 = vmul.bf16 %v1891, %v1124
      %s1894 = scalar_lea.vmem %s12, 20
      %v1895 = vld [vmem:[%s1894] sm:$0xf]
      %v1898 = vunpack.c.l.b16 %v1892
      %v1899 = vunpack.c.h.b16 %v1892
      %v1900 = vunpack.c.l.b16 %v1893
      %v1901 = vpack.c.b16 %v1898, %v1898
      %v1902 = vpack.c.b16 %v1899, %v1899
      %v1903 = vpack.c.b16 %v1900, %v1900
      %1904 = vrot.lane.b32.xlu0 %v1901, 127
      %v1905 = vpop.permute.xlu0 %1904
      %1906 = vrot.lane.b32.xlu0 %v1902, 127
      %v1907 = vpop.permute.xlu0 %1906
      %1908 = vrot.lane.b32.xlu0 %v1903, 127
      %v1909 = vpop.permute.xlu0 %1908
      %v1910 = vsel %vm983, %v1905, %v1907
      %v1911 = vsel %vm983, %v1907, %v1909
      %v1913 = vsel %vm776, %v1895, 0
      %v1916 = vsel %vm780, %v1910, 0
      %v1919 = vsel %vm780, %v1911, 0
      %1921 = vmatprep.subr.bf16.mxu0 0
      %1922 = vmatpush1.bf16.msra.mxu0 0
      %1923 = vmatprep.subr.bf16.mxu0 0
      %1924 = vmatpush1.bf16.msra.mxu0 0
      %1925 = vmatprep.subr.bf16.mxu0 0
      %1926 = vmatpush1.bf16.msra.mxu0 0
      %1927 = vmatprep.subr.bf16.mxu0 0
      %1928 = vmatpush1.bf16.msra.mxu0 0
      %1929 = vmatprep.subr.bf16.mxu0 0
      %1930 = vmatpush1.bf16.msra.mxu0 0
      %1931 = vmatprep.subr.bf16.mxu0 0
      %1932 = vmatpush1.bf16.msra.mxu0 0
      %1933 = vmatprep.subr.bf16.mxu0 0
      %1934 = vmatpush1.bf16.msra.mxu0 0
      %1935 = vmatprep.subr.bf16.mxu0 %v1919
      %1936 = vmatpush1.bf16.msra.mxu0 %v1916
      %1937 = vmatprep.subr.bf16.mxu0 0
      %1938 = vmatpush2.bf16.msra.mxu0 0
      %1939 = vmatprep.subr.bf16.mxu0 0
      %1940 = vmatpush2.bf16.msra.mxu0 0
      %1941 = vmatprep.subr.bf16.mxu0 0
      %1942 = vmatpush2.bf16.msra.mxu0 0
      %1943 = vmatprep.subr.bf16.mxu0 0
      %1944 = vmatpush2.bf16.msra.mxu0 0
      %1945 = vmatprep.subr.bf16.mxu0 0
      %1946 = vmatpush2.bf16.msra.mxu0 0
      %1947 = vmatprep.subr.bf16.mxu0 0
      %1948 = vmatpush2.bf16.msra.mxu0 0
      %1949 = vmatprep.subr.bf16.mxu0 0
      %1950 = vmatpush2.bf16.msra.mxu0 0
      %1951 = vmatprep.subr.bf16.mxu0 0
      %1952 = vmatpush2.bf16.msra.mxu0 0
      %1953 = vmatprep.mubr.bf16.mxu0 0
      %1954 = vmatmul.mubr.bf16.gmra.mxu0 %v1913
      %v1955 = vpop.f32.mrf.mxu0
      %v1956 = vadd.f32 0.0, %v1955
      %v1957 = vpop.f32.mrf.mxu0
      %v1958 = vadd.f32 0.0, %v1957
      %v1959 = vpop.f32.mrf.mxu0
      %v1960 = vpop.f32.mrf.mxu0
      %1961 = vdwg.mxu0
      %v1962 = vadd.f32 %v1888, %v1956
      %v1963 = vadd.f32 %v1889, %v1958
      %v1964 = vmul.bf16 %v1890, %v1203
      %v1965 = vmul.bf16 %v1891, %v1202
      %s1966 = scalar_lea.vmem %s12, 24
      %v1967 = vld [vmem:[%s1966] sm:$0xf]
      %v1970 = vunpack.c.l.b16 %v1964
      %v1971 = vunpack.c.h.b16 %v1964
      %v1972 = vunpack.c.l.b16 %v1965
      %v1973 = vpack.c.b16 %v1970, %v1970
      %v1974 = vpack.c.b16 %v1971, %v1971
      %v1975 = vpack.c.b16 %v1972, %v1972
      %1976 = vrot.lane.b32.xlu0 %v1973, 113
      %v1977 = vpop.permute.xlu0 %1976
      %1978 = vrot.lane.b32.xlu0 %v1974, 113
      %v1979 = vpop.permute.xlu0 %1978
      %1980 = vrot.lane.b32.xlu0 %v1975, 113
      %v1981 = vpop.permute.xlu0 %1980
      %v1982 = vsel %vm903, %v1977, %v1979
      %v1983 = vsel %vm903, %v1979, %v1981
      %v1985 = vsel %vm776, %v1967, 0
      %v1988 = vsel %vm780, %v1982, 0
      %v1991 = vsel %vm780, %v1983, 0
      %1993 = vmatprep.subr.bf16.mxu0 0
      %1994 = vmatpush1.bf16.msra.mxu0 0
      %1995 = vmatprep.subr.bf16.mxu0 0
      %1996 = vmatpush1.bf16.msra.mxu0 0
      %1997 = vmatprep.subr.bf16.mxu0 0
      %1998 = vmatpush1.bf16.msra.mxu0 0
      %1999 = vmatprep.subr.bf16.mxu0 0
      %2000 = vmatpush1.bf16.msra.mxu0 0
      %2001 = vmatprep.subr.bf16.mxu0 0
      %2002 = vmatpush1.bf16.msra.mxu0 0
      %2003 = vmatprep.subr.bf16.mxu0 0
      %2004 = vmatpush1.bf16.msra.mxu0 0
      %2005 = vmatprep.subr.bf16.mxu0 0
      %2006 = vmatpush1.bf16.msra.mxu0 0
      %2007 = vmatprep.subr.bf16.mxu0 %v1991
      %2008 = vmatpush1.bf16.msra.mxu0 %v1988
      %2009 = vmatprep.subr.bf16.mxu0 0
      %2010 = vmatpush2.bf16.msra.mxu0 0
      %2011 = vmatprep.subr.bf16.mxu0 0
      %2012 = vmatpush2.bf16.msra.mxu0 0
      %2013 = vmatprep.subr.bf16.mxu0 0
      %2014 = vmatpush2.bf16.msra.mxu0 0
      %2015 = vmatprep.subr.bf16.mxu0 0
      %2016 = vmatpush2.bf16.msra.mxu0 0
      %2017 = vmatprep.subr.bf16.mxu0 0
      %2018 = vmatpush2.bf16.msra.mxu0 0
      %2019 = vmatprep.subr.bf16.mxu0 0
      %2020 = vmatpush2.bf16.msra.mxu0 0
      %2021 = vmatprep.subr.bf16.mxu0 0
      %2022 = vmatpush2.bf16.msra.mxu0 0
      %2023 = vmatprep.subr.bf16.mxu0 0
      %2024 = vmatpush2.bf16.msra.mxu0 0
      %2025 = vmatprep.mubr.bf16.mxu0 0
      %2026 = vmatmul.mubr.bf16.gmra.mxu0 %v1985
      %v2027 = vpop.f32.mrf.mxu0
      %v2028 = vadd.f32 0.0, %v2027
      %v2029 = vpop.f32.mrf.mxu0
      %v2030 = vadd.f32 0.0, %v2029
      %v2031 = vpop.f32.mrf.mxu0
      %v2032 = vpop.f32.mrf.mxu0
      %2033 = vdwg.mxu0
      %v2034 = vadd.f32 %v1962, %v2028
      %v2035 = vadd.f32 %v1963, %v2030
      %s2036 = scalar_lea.vmem %s12, 28
      %v2037 = vld [vmem:[%s2036] sm:$0xf]
      %v2040 = vunpack.c.l.b16 %v1890
      %v2041 = vunpack.c.h.b16 %v1890
      %v2042 = vunpack.c.l.b16 %v1891
      %v2043 = vpack.c.b16 %v2040, %v2040
      %v2044 = vpack.c.b16 %v2041, %v2041
      %v2045 = vpack.c.b16 %v2042, %v2042
      %2046 = vrot.lane.b32.xlu0 %v2043, 112
      %v2047 = vpop.permute.xlu0 %2046
      %2048 = vrot.lane.b32.xlu0 %v2044, 112
      %v2049 = vpop.permute.xlu0 %2048
      %2050 = vrot.lane.b32.xlu0 %v2045, 112
      %v2051 = vpop.permute.xlu0 %2050
      %v2052 = vsel %vm1294, %v2047, %v2049
      %v2053 = vsel %vm1294, %v2049, %v2051
      %v2055 = vsel %vm776, %v2037, 0
      %v2058 = vsel %vm780, %v2052, 0
      %v2061 = vsel %vm780, %v2053, 0
      %2063 = vmatprep.subr.bf16.mxu0 0
      %2064 = vmatpush1.bf16.msra.mxu0 0
      %2065 = vmatprep.subr.bf16.mxu0 0
      %2066 = vmatpush1.bf16.msra.mxu0 0
      %2067 = vmatprep.subr.bf16.mxu0 0
      %2068 = vmatpush1.bf16.msra.mxu0 0
      %2069 = vmatprep.subr.bf16.mxu0 0
      %2070 = vmatpush1.bf16.msra.mxu0 0
      %2071 = vmatprep.subr.bf16.mxu0 0
      %2072 = vmatpush1.bf16.msra.mxu0 0
      %2073 = vmatprep.subr.bf16.mxu0 0
      %2074 = vmatpush1.bf16.msra.mxu0 0
      %2075 = vmatprep.subr.bf16.mxu0 0
      %2076 = vmatpush1.bf16.msra.mxu0 0
      %2077 = vmatprep.subr.bf16.mxu0 %v2061
      %2078 = vmatpush1.bf16.msra.mxu0 %v2058
      %2079 = vmatprep.subr.bf16.mxu0 0
      %2080 = vmatpush2.bf16.msra.mxu0 0
      %2081 = vmatprep.subr.bf16.mxu0 0
      %2082 = vmatpush2.bf16.msra.mxu0 0
      %2083 = vmatprep.subr.bf16.mxu0 0
      %2084 = vmatpush2.bf16.msra.mxu0 0
      %2085 = vmatprep.subr.bf16.mxu0 0
      %2086 = vmatpush2.bf16.msra.mxu0 0
      %2087 = vmatprep.subr.bf16.mxu0 0
      %2088 = vmatpush2.bf16.msra.mxu0 0
      %2089 = vmatprep.subr.bf16.mxu0 0
      %2090 = vmatpush2.bf16.msra.mxu0 0
      %2091 = vmatprep.subr.bf16.mxu0 0
      %2092 = vmatpush2.bf16.msra.mxu0 0
      %2093 = vmatprep.subr.bf16.mxu0 0
      %2094 = vmatpush2.bf16.msra.mxu0 0
      %2095 = vmatprep.mubr.bf16.mxu0 0
      %2096 = vmatmul.mubr.bf16.gmra.mxu0 %v2055
      %v2097 = vpop.f32.mrf.mxu0
      %v2098 = vadd.f32 0.0, %v2097
      %v2099 = vpop.f32.mrf.mxu0
      %v2100 = vadd.f32 0.0, %v2099
      %v2101 = vpop.f32.mrf.mxu0
      %v2102 = vpop.f32.mrf.mxu0
      %2103 = vdwg.mxu0
      %v2104 = vadd.f32 %v2034, %v2098
      %v2105 = vadd.f32 %v2035, %v2100
      %v2106 = vmul.bf16 %v1890, %v1352
      %v2107 = vmul.bf16 %v1891, %v1351
      %s2108 = scalar_lea.vmem %s12, 32
      %v2109 = vld [vmem:[%s2108] sm:$0xf]
      %v2112 = vunpack.c.l.b16 %v2106
      %v2113 = vunpack.c.h.b16 %v2106
      %v2114 = vunpack.c.l.b16 %v2107
      %v2115 = vpack.c.b16 %v2112, %v2112
      %v2116 = vpack.c.b16 %v2113, %v2113
      %v2117 = vpack.c.b16 %v2114, %v2114
      %2118 = vrot.lane.b32.xlu0 %v2115, 111
      %v2119 = vpop.permute.xlu0 %2118
      %2120 = vrot.lane.b32.xlu0 %v2116, 111
      %v2121 = vpop.permute.xlu0 %2120
      %2122 = vrot.lane.b32.xlu0 %v2117, 111
      %v2123 = vpop.permute.xlu0 %2122
      %v2124 = vsel %vm750, %v2119, %v2121
      %v2125 = vsel %vm750, %v2121, %v2123
      %v2127 = vsel %vm776, %v2109, 0
      %v2130 = vsel %vm780, %v2124, 0
      %v2133 = vsel %vm780, %v2125, 0
      %2135 = vmatprep.subr.bf16.mxu0 0
      %2136 = vmatpush1.bf16.msra.mxu0 0
      %2137 = vmatprep.subr.bf16.mxu0 0
      %2138 = vmatpush1.bf16.msra.mxu0 0
      %2139 = vmatprep.subr.bf16.mxu0 0
      %2140 = vmatpush1.bf16.msra.mxu0 0
      %2141 = vmatprep.subr.bf16.mxu0 0
      %2142 = vmatpush1.bf16.msra.mxu0 0
      %2143 = vmatprep.subr.bf16.mxu0 0
      %2144 = vmatpush1.bf16.msra.mxu0 0
      %2145 = vmatprep.subr.bf16.mxu0 0
      %2146 = vmatpush1.bf16.msra.mxu0 0
      %2147 = vmatprep.subr.bf16.mxu0 0
      %2148 = vmatpush1.bf16.msra.mxu0 0
      %2149 = vmatprep.subr.bf16.mxu0 %v2133
      %2150 = vmatpush1.bf16.msra.mxu0 %v2130
      %2151 = vmatprep.subr.bf16.mxu0 0
      %2152 = vmatpush2.bf16.msra.mxu0 0
      %2153 = vmatprep.subr.bf16.mxu0 0
      %2154 = vmatpush2.bf16.msra.mxu0 0
      %2155 = vmatprep.subr.bf16.mxu0 0
      %2156 = vmatpush2.bf16.msra.mxu0 0
      %2157 = vmatprep.subr.bf16.mxu0 0
      %2158 = vmatpush2.bf16.msra.mxu0 0
      %2159 = vmatprep.subr.bf16.mxu0 0
      %2160 = vmatpush2.bf16.msra.mxu0 0
      %2161 = vmatprep.subr.bf16.mxu0 0
      %2162 = vmatpush2.bf16.msra.mxu0 0
      %2163 = vmatprep.subr.bf16.mxu0 0
      %2164 = vmatpush2.bf16.msra.mxu0 0
      %2165 = vmatprep.subr.bf16.mxu0 0
      %2166 = vmatpush2.bf16.msra.mxu0 0
      %2167 = vmatprep.mubr.bf16.mxu0 0
      %2168 = vmatmul.mubr.bf16.gmra.mxu0 %v2127
      %v2169 = vpop.f32.mrf.mxu0
      %v2170 = vadd.f32 0.0, %v2169
      %v2171 = vpop.f32.mrf.mxu0
      %v2172 = vadd.f32 0.0, %v2171
      %v2173 = vpop.f32.mrf.mxu0
      %v2174 = vpop.f32.mrf.mxu0
      %2175 = vdwg.mxu0
      %v2176 = vadd.f32 %v2104, %v2170
      %v2177 = vadd.f32 %v2105, %v2172
      %2179 = vset.pattern.permute.xlu0 0
      %2180 = vperm.xlu0 %2179, %v1530
      %v2181 = vpop.permute.xlu0 %2180
      %v2183 = vmul.f32 %v2176, %v2181
      %v2184 = vmul.f32 %v2177, %v2181
      %v2185 = vadd.f32 %v2183, %v588
      %v2186 = vadd.f32 %v2184, %v590
      %2187 = vst [vmem:[%s498] sm:$0xff] %v2185
      %2188 = vst [vmem:[%s498 + $0x8] sm:$0xff] %v2186
      %p2189 = scmp.lt.s32.totalorder %s25, 1
      %s2190 = scalar_select %p2189, %s25, 1
      %s2191 = smul.addr %s2190, 2
      %s2192 = smul.addr %s2191, 8
      %s2193 = scalar_lea.vmem %s14, %s2192
      // Predicated region
      $region77: #{up_block_forward.1} parent=75 // pred_check
        %p2194 = pneg %p352
      $region78: #{up_block_forward.1} parent=75 // pred_check_branch
        %2196 = sbr.rel (%p2194) target = $region80
      $region79: #{up_block_forward.1} parent=75 // pred_region
        _
      $region80: #{up_block_forward.1} parent=75 // pred_fallthru
        _
    $region76: #{up_block_forward.1} parent=5 // pred_fallthru
      _
    %p2197 = scmp.le.s32.totalorder 2, %s20
    // Predicated region
    $region81: #{up_block_forward.1} parent=5 // pred_check
      %p2198 = pneg %p2197
    $region82: #{up_block_forward.1} parent=5 // pred_check_branch
      %2200 = sbr.rel (%p2198) target = $region84
    $region83: #{up_block_forward.1} parent=5 // pred_region
      %s2201 = ssub.s32 %s20, 2
      // Predicated region
      $region85: #{up_block_forward.1} parent=83 // pred_check
        %p2202 = pneg %p358
      $region86: #{up_block_forward.1} parent=83 // pred_check_branch
        %2204 = sbr.rel (%p2202) target = $region88
      $region87: #{up_block_forward.1} parent=83 // pred_region
        %p2205 = scmp.lt.s32.totalorder %s26, 1
        %s2206 = scalar_select %p2205, %s26, 1
        %s2207 = smul.addr %s2206, 2
        %s2208 = smul.addr %s2207, 8
        %s2209 = scalar_lea.vmem %s14, %s2208
      $region88: #{up_block_forward.1} parent=83 // pred_fallthru
        _
    $region84: #{up_block_forward.1} parent=5 // pred_fallthru
      _
  $region6: #{up_block_forward.1} parent=0 // loop_footer
    %s24 = sadd.s32 1, %s20
  $region7: #{up_block_forward.1} parent=0 // loop_footer_branch
    %19 = sbr.rel target = $region3
  $region8: #{up_block_forward.1} parent=0 // loop_exit
    _

</llo_original>
